<compile_context>
chip_gen: v7x
topology: tpu7x:2x2x1
jax: 0.10.0
libtpu: 0.0.40
codegen_flags: <defaults>
</compile_context>

<pallas_src>
import functools

import jax
import jax.numpy as jnp
from jax import lax
from jax.experimental import pallas as pl
from jax.experimental.pallas import tpu as pltpu


def _default_vmem_limit():
    # Generation-gated scoped-VMEM budget: ~3/4 of physical, capped at 96 MiB
    # (=> 96 MiB on v5e/v6e, 48 MiB on v7x).  Conservative 32 MiB fallback.
    try:
        phys = int(getattr(pltpu.get_tpu_info(), "vmem_capacity_bytes",
                           128 * 1024 * 1024))
        return max(32 * 1024 * 1024, min(phys * 3 // 4, 96 * 1024 * 1024))
    except Exception:
        return 32 * 1024 * 1024


_VMEM_LIMIT = _default_vmem_limit()


def _pick_tile(dim, target, align):
    """Largest tile <= target dividing `dim`, preferring `align`-multiples
    (then 8-multiples).  Falls back to the full dimension (always legal)."""
    if dim <= target:
        return dim
    for a in (align, 8):
        t = (target // a) * a
        while t >= a:
            if dim % t == 0:
                return t
            t -= a
    return dim


# ------------------------------------------------------------------ tiled linear: y = x @ W + b
def _linear_kernel(x_ref, w_ref, b_ref, o_ref, acc_ref):
    k = pl.program_id(2)

    @pl.when(k == 0)
    def _():
        acc_ref[...] = jnp.zeros_like(acc_ref)

    # bf16 operands, f32 accumulation on the MXU.
    acc_ref[...] += jnp.dot(x_ref[...], w_ref[...],
                            preferred_element_type=jnp.float32)

    @pl.when(k == pl.num_programs(2) - 1)
    def _():
        o_ref[...] = (acc_ref[...] + b_ref[...]).astype(o_ref.dtype)


def pallas_linear(x2d, w, bias, *, out_dtype=jnp.float32,
                  tm_target=512, tn_target=512, tk_target=512):
    """x2d: (M, K) bf16, w: (K, N) bf16 (already transposed), bias: (N,) f32."""
    M, K = x2d.shape
    N = w.shape[1]
    tm = _pick_tile(M, tm_target, 8)
    tn = _pick_tile(N, tn_target, 128)
    tk = _pick_tile(K, tk_target, 128)
    grid = (M // tm, N // tn, K // tk)
    return pl.pallas_call(
        _linear_kernel,
        out_shape=jax.ShapeDtypeStruct((M, N), out_dtype),
        grid=grid,
        in_specs=[
            pl.BlockSpec((tm, tk), lambda i, j, k: (i, k)),
            pl.BlockSpec((tk, tn), lambda i, j, k: (k, j)),
            pl.BlockSpec((1, tn), lambda i, j, k: (0, j)),
        ],
        out_specs=pl.BlockSpec((tm, tn), lambda i, j, k: (i, j)),
        scratch_shapes=[pltpu.VMEM((tm, tn), jnp.float32)],
        compiler_params=pltpu.CompilerParams(
            dimension_semantics=("parallel", "parallel", "arbitrary"),
            vmem_limit_bytes=_VMEM_LIMIT,
        ),
    )(x2d, w, bias.reshape(1, N).astype(jnp.float32))


# ------------------------------------------------------------------ flash-style disentangled attention
def _attn_kernel(q_ref, k_ref, v_ref, pq_ref, pk_ref, alpha_ref,
                 o_ref, m_ref, l_ref, acc_ref, *, num_heads, head_dim):
    ki = pl.program_id(2)

    @pl.when(ki == 0)
    def _():
        m_ref[...] = jnp.full_like(m_ref, -jnp.inf)
        l_ref[...] = jnp.zeros_like(l_ref)
        acc_ref[...] = jnp.zeros_like(acc_ref)

    H, Dh = num_heads, head_dim

    def split_heads(ref):
        # Lane-dense (1, T, H*Dh) bf16 VMEM tile -> head-batched (H, T, Dh)
        # value built from ref slices (no (T, H*Dh) value is materialized).
        return jnp.stack(
            [ref[0, :, h * Dh:(h + 1) * Dh] for h in range(H)], axis=0)

    q3 = split_heads(q_ref)                                        # (H, Tq, Dh)
    k3 = split_heads(k_ref)                                        # (H, Tk, Dh)
    v3 = split_heads(v_ref)                                        # (H, Tk, Dh)

    # Content scores for all heads in ONE batched MXU call -> (H, Tq, Tk) f32.
    # (1/sqrt(Dh) is already folded into the Q projection weights.)
    s = lax.dot_general(q3, k3, (((2,), (2,)), ((0,), (0,))),
                        preferred_element_type=jnp.float32)

    # Relative-position scores for this (q-tile, k-tile), shared by all heads,
    # recomputed on the fly (tiny MXU matmul; no (S, S) HBM intermediate).
    pos = lax.dot_general(pq_ref[...], pk_ref[...], (((1,), (1,)), ((), ())),
                          preferred_element_type=jnp.float32)       # (Tq, Tk)
    s = s + alpha_ref[...] * pos[None]
    # (+ beta[h]: per-head constant shift before softmax -> softmax-invariant,
    #  intentionally omitted; output is identical.)

    m_prev = m_ref[...]                                             # (H, Tq, 1)
    m_new = jnp.maximum(m_prev, jnp.max(s, axis=-1, keepdims=True))
    corr = jnp.exp(m_prev - m_new)
    p = jnp.exp(s - m_new)                                          # (H, Tq, Tk)
    l_ref[...] = corr * l_ref[...] + jnp.sum(p, axis=-1, keepdims=True)
    pv = lax.dot_general(p.astype(v3.dtype), v3,                    # bf16 MXU
                         (((2,), (1,)), ((0,), (0,))),
                         preferred_element_type=jnp.float32)        # (H, Tq, Dh)
    acc_ref[...] = corr * acc_ref[...] + pv
    m_ref[...] = m_new

    @pl.when(ki == pl.num_programs(2) - 1)
    def _():
        # Exact division: runs once per output tile, off the kv loop.
        out = acc_ref[...] / l_ref[...]                             # (H, Tq, Dh)
        # Assemble heads into ONE lane-dense (Tq, H*Dh) slab -> single store.
        out = jnp.concatenate([out[h] for h in range(H)], axis=-1)  # (Tq, D)
        o_ref[0, :, :] = out.astype(o_ref.dtype)


def pallas_attention(q_arr, k_arr, v_arr, pos, alpha, *, num_heads, head_dim,
                     q_col=0, k_col=0, v_col=0, tq_target=256, tk_target=512):
    """q/k/v arrays: bf16 — either the fused (B, S, 3*D) projection (with
    q_col/k_col/v_col selecting the D-wide column block) or three separate
    (B, S, D) arrays.  pos: (S, head_dim) bf16.  alpha: (H, 1, 1) f32."""
    B, S = q_arr.shape[0], q_arr.shape[1]
    D = num_heads * head_dim
    Tq = _pick_tile(S, tq_target, 128)
    Tk = _pick_tile(S, tk_target, 128)
    grid = (B, S // Tq, S // Tk)                  # kv (reduction) axis last

    q_spec = pl.BlockSpec((1, Tq, D), lambda b, qi, ki, c=q_col: (b, qi, c))
    k_spec = pl.BlockSpec((1, Tk, D), lambda b, qi, ki, c=k_col: (b, ki, c))
    v_spec = pl.BlockSpec((1, Tk, D), lambda b, qi, ki, c=v_col: (b, ki, c))

    return pl.pallas_call(
        functools.partial(_attn_kernel, num_heads=num_heads, head_dim=head_dim),
        out_shape=jax.ShapeDtypeStruct((B, S, D), jnp.bfloat16),
        grid=grid,
        in_specs=[
            q_spec, k_spec, v_spec,
            pl.BlockSpec((Tq, head_dim), lambda b, qi, ki: (qi, 0)),
            pl.BlockSpec((Tk, head_dim), lambda b, qi, ki: (ki, 0)),
            pl.BlockSpec((num_heads, 1, 1), lambda b, qi, ki: (0, 0, 0)),
        ],
        out_specs=pl.BlockSpec((1, Tq, D), lambda b, qi, ki: (b, qi, 0)),
        scratch_shapes=[
            pltpu.VMEM((num_heads, Tq, 1), jnp.float32),           # running max
            pltpu.VMEM((num_heads, Tq, 1), jnp.float32),           # running denom
            pltpu.VMEM((num_heads, Tq, head_dim), jnp.float32),    # output acc
        ],
        compiler_params=pltpu.CompilerParams(
            # B and q-tile axes are parallel (sharded across v7x's 2 TCs when
            # B * S/Tq >= 2); the kv axis carries the online-softmax state.
            dimension_semantics=("parallel", "parallel", "arbitrary"),
            vmem_limit_bytes=_VMEM_LIMIT,
        ),
    )(q_arr, k_arr, v_arr, pos, pos, alpha)


# ------------------------------------------------------------------ forward
def prepare_params(params, *, num_heads):
    """One-time param prep (outside the per-call path): weight transposes,
    QKV fusion, 1/sqrt(head_dim) folded into the Q projection, bf16 casts."""
    d_model = params["wq"].shape[0]
    head_dim = d_model // num_heads
    scale = 1.0 / (head_dim ** 0.5)
    w_qkv = jnp.concatenate(
        [params["wq"].T * scale, params["wk"].T, params["wv"].T], axis=1)
    b_qkv = jnp.concatenate(
        [params["bq"] * scale, params["bk"], params["bv"]])
    return dict(
        w_qkv=w_qkv.astype(jnp.bfloat16),                  # (D, 3D)
        b_qkv=b_qkv.astype(jnp.float32),                   # (3D,)
        wo_t=params["wo"].T.astype(jnp.bfloat16),          # (D, D)
        bo=params["bo"].astype(jnp.float32),
        pos_embed=params["pos_embed"].astype(jnp.bfloat16),
        alpha=params["alpha"].reshape(num_heads, 1, 1).astype(jnp.float32),
    )


def disentangled_attention(x, prepared, *, num_heads):
    """Forward pass of DisentangledAttention (mask=None, no dropout)."""
    B, S, D = x.shape
    Dh = D // num_heads
    x2d = x.reshape(B * S, D).astype(jnp.bfloat16)

    if D % 128 == 0:
        # Fused Q/K/V projection: one tiled matmul, x read from HBM once; the
        # attention kernel indexes q/k/v straight out of the fused result via
        # BlockSpec column blocks (no activation slicing / HBM round-trips).
        qkv = pallas_linear(x2d, prepared["w_qkv"], prepared["b_qkv"],
                            out_dtype=jnp.bfloat16).reshape(B, S, 3 * D)
        q_arr = k_arr = v_arr = qkv
        cols = (0, 1, 2)
    else:
        # Lane-unaligned D: three separate projections (x is re-read, but the
        # activations never round-trip through HBM slices).
        # TODO(synk): pad the fused projection to a 128-multiple instead.
        q_arr, k_arr, v_arr = (
            pallas_linear(x2d, prepared["w_qkv"][:, i * D:(i + 1) * D],
                          prepared["b_qkv"][i * D:(i + 1) * D],
                          out_dtype=jnp.bfloat16).reshape(B, S, D)
            for i in range(3))
        cols = (0, 0, 0)

    pos = prepared["pos_embed"][:S]                        # (S, Dh) bf16
    attn = pallas_attention(q_arr, k_arr, v_arr, pos, prepared["alpha"],
                            num_heads=num_heads, head_dim=Dh,
                            q_col=cols[0], k_col=cols[1], v_col=cols[2])

    out = pallas_linear(attn.reshape(B * S, D), prepared["wo_t"],
                        prepared["bo"], out_dtype=jnp.float32)
    return out.reshape(B, S, D)


# ------------------------------------------------------------------ reference (pure JAX, f32)
def reference_forward(x, params, num_heads):
    B, S, D = x.shape
    Dh = D // num_heads

    def lin(w, b):
        return x @ w.T + b

    def heads(y):
        return y.reshape(B, S, num_heads, Dh).transpose(0, 2, 1, 3)

    q = heads(lin(params["wq"], params["bq"]))
    k = heads(lin(params["wk"], params["bk"]))
    v = heads(lin(params["wv"], params["bv"]))
    content = jnp.einsum("bhqd,bhkd->bhqk", q, k) / (Dh ** 0.5)
    pe = params["pos_embed"][:S]
    pos = (pe @ pe.T)[None]                                # (1, S, S)
    scores = content + (params["alpha"] * pos + params["beta"])[None]
    probs = jax.nn.softmax(scores, axis=-1)
    out = jnp.einsum("bhqk,bhkd->bhqd", probs, v)
    out = out.transpose(0, 2, 1, 3).reshape(B, S, D)
    return out @ params["wo"].T + params["bo"]


# ------------------------------------------------------------------ params
def init_params(key, d_model, num_heads, max_seq_len):
    head_dim = d_model // num_heads
    ks = jax.random.split(key, 9)

    def lin_init(kw, kb, fan_in, fan_out):
        bound = 1.0 / (fan_in ** 0.5)
        w = jax.random.uniform(kw, (fan_out, fan_in), jnp.float32, -bound, bound)
        b = jax.random.uniform(kb, (fan_out,), jnp.float32, -bound, bound)
        return w, b

    wq, bq = lin_init(ks[0], ks[1], d_model, d_model)
    wk, bk = lin_init(ks[2], ks[3], d_model, d_model)
    wv, bv = lin_init(ks[4], ks[5], d_model, d_model)
    wo, bo = lin_init(ks[6], ks[7], d_model, d_model)
    limit = (6.0 / (max_seq_len + head_dim)) ** 0.5        # xavier_uniform
    pos_embed = jax.random.uniform(
        ks[8], (max_seq_len, head_dim), jnp.float32, -limit, limit)
    return dict(
        wq=wq, bq=bq, wk=wk, bk=bk, wv=wv, bv=bv, wo=wo, bo=bo,
        pos_embed=pos_embed,
        alpha=jnp.ones((num_heads, 1, 1), jnp.float32),
        beta=jnp.zeros((num_heads, 1, 1), jnp.float32),
    )


# ------------------------------------------------------------------ main
if __name__ == "__main__":
    d_model, num_heads, max_seq_len = 128, 4, 16
    B, S = 2, 8

    key = jax.random.PRNGKey(0)
    k_x, k_p = jax.random.split(key)
    x = jax.random.normal(k_x, (B, S, d_model), jnp.float32)
    params = init_params(k_p, d_model, num_heads, max_seq_len)
    prepared = prepare_params(params, num_heads=num_heads)

    fwd = jax.jit(functools.partial(disentangled_attention, num_heads=num_heads))
    out = jax.block_until_ready(fwd(x, prepared))

    ref = reference_forward(x, params, num_heads)
    assert out.shape == (B, S, d_model)
    # bf16 MXU operands (f32 accumulation) vs. the pure-f32 reference:
    # tolerance re-baselined accordingly.
    assert jnp.allclose(out, ref, atol=2e-2, rtol=2e-2), \
        float(jnp.max(jnp.abs(out - ref)))

    print("KERNEL_OK")
</pallas_src>

<mosaic_0001>
module attributes {stable_mosaic.version = 11 : i64} {
  func.func @_linear_kernel(%arg0: i32, %arg1: i32, %arg2: i32, %arg3: memref<16x128xbf16, #tpu.memory_space<vmem>>, %arg4: memref<128x384xbf16, #tpu.memory_space<vmem>>, %arg5: memref<1x384xf32, #tpu.memory_space<vmem>>, %arg6: memref<16x384xbf16, #tpu.memory_space<vmem>>, %arg7: memref<16x384xf32, #tpu.memory_space<vmem>>) attributes {dimension_semantics = [#tpu.dimension_semantics<parallel>, #tpu.dimension_semantics<parallel>, #tpu.dimension_semantics<arbitrary>], iteration_bounds = array<i64: 1, 1, 1>, scalar_prefetch = 0 : i64, scratch_operands = 1 : i64, tpu.core_type = #tpu.core_type<tc>, window_params = [{transform_indices = @transform_0, window_bounds = array<i64: 16, 128>}, {transform_indices = @transform_1, window_bounds = array<i64: 128, 384>}, {transform_indices = @transform_2, window_bounds = array<i64: 1, 384>}, {transform_indices = @transform_3, window_bounds = array<i64: 16, 384>}]} {
    %c0_i32 = arith.constant 0 : i32
    %0 = arith.cmpi eq, %arg2, %c0_i32 : i32
    %1 = arith.extui %0 : i1 to i32
    %c0_i32_0 = arith.constant 0 : i32
    %2 = arith.cmpi ne, %1, %c0_i32_0 : i32
    scf.if %2 {
      %cst_10 = arith.constant 0.000000e+00 : f32
      %12 = vector.broadcast %cst_10 : f32 to vector<16x384xf32>
      %c0_11 = arith.constant 0 : index
      %c0_12 = arith.constant 0 : index
      %13 = vector.load %arg7[%c0_11, %c0_12] : memref<16x384xf32, #tpu.memory_space<vmem>>, vector<16x384xf32>
      tpu.vector_store %arg7[%c0_11, %c0_12], %12 {strides = array<i32>} : memref<16x384xf32, #tpu.memory_space<vmem>>, vector<16x384xf32>,
    } else {
    }
    %c0 = arith.constant 0 : index
    %c0_1 = arith.constant 0 : index
    %3 = vector.load %arg7[%c0, %c0_1] : memref<16x384xf32, #tpu.memory_space<vmem>>, vector<16x384xf32>
    %c0_2 = arith.constant 0 : index
    %c0_3 = arith.constant 0 : index
    %4 = vector.load %arg3[%c0_2, %c0_3] : memref<16x128xbf16, #tpu.memory_space<vmem>>, vector<16x128xbf16>
    %c0_4 = arith.constant 0 : index
    %c0_5 = arith.constant 0 : index
    %5 = vector.load %arg4[%c0_4, %c0_5] : memref<128x384xbf16, #tpu.memory_space<vmem>>, vector<128x384xbf16>
    %cst = arith.constant dense<0.000000e+00> : vector<16x384xf32>
    %6 = tpu.matmul %4, %5, %cst {dimension_numbers = #tpu.dot_dimension_numbers<[1], [0], [0], [1], [0, 0, 1, 1], [], []>} : vector<16x128xbf16>, vector<128x384xbf16>, vector<16x384xf32> -> vector<16x384xf32>
    %7 = arith.addf %3, %6 : vector<16x384xf32>
    %c0_6 = arith.constant 0 : index
    %c0_7 = arith.constant 0 : index
    %8 = vector.load %arg7[%c0_6, %c0_7] : memref<16x384xf32, #tpu.memory_space<vmem>>, vector<16x384xf32>
    tpu.vector_store %arg7[%c0_6, %c0_7], %7 {strides = array<i32>} : memref<16x384xf32, #tpu.memory_space<vmem>>, vector<16x384xf32>,
    %c0_i32_8 = arith.constant 0 : i32
    %9 = arith.cmpi eq, %arg2, %c0_i32_8 : i32
    %10 = arith.extui %9 : i1 to i32
    %c0_i32_9 = arith.constant 0 : i32
    %11 = arith.cmpi ne, %10, %c0_i32_9 : i32
    scf.if %11 {
      %c0_10 = arith.constant 0 : index
      %c0_11 = arith.constant 0 : index
      %12 = vector.load %arg7[%c0_10, %c0_11] : memref<16x384xf32, #tpu.memory_space<vmem>>, vector<16x384xf32>
      %c0_12 = arith.constant 0 : index
      %c0_13 = arith.constant 0 : index
      %13 = vector.load %arg5[%c0_12, %c0_13] : memref<1x384xf32, #tpu.memory_space<vmem>>, vector<1x384xf32>
      %14 = vector.broadcast %13 : vector<1x384xf32> to vector<16x384xf32>
      %15 = arith.addf %12, %14 : vector<16x384xf32>
      %16 = arith.truncf %15 : vector<16x384xf32> to vector<16x384xbf16>
      %c0_14 = arith.constant 0 : index
      %c0_15 = arith.constant 0 : index
      %17 = vector.load %arg6[%c0_14, %c0_15] : memref<16x384xbf16, #tpu.memory_space<vmem>>, vector<16x384xbf16>
      tpu.vector_store %arg6[%c0_14, %c0_15], %16 {strides = array<i32>} : memref<16x384xbf16, #tpu.memory_space<vmem>>, vector<16x384xbf16>,
    } else {
    }
    return
  }
  func.func @transform_0(%arg0: i32, %arg1: i32, %arg2: i32) -> (i32, i32) {
    %c0_i32 = arith.constant 0 : i32
    return %arg0, %arg2 : i32, i32
  }
  func.func @transform_1(%arg0: i32, %arg1: i32, %arg2: i32) -> (i32, i32) {
    %c0_i32 = arith.constant 0 : i32
    return %arg2, %arg1 : i32, i32
  }
  func.func @transform_2(%arg0: i32, %arg1: i32, %arg2: i32) -> (i32, i32) {
    %c0_i32 = arith.constant 0 : i32
    %c0_i32_0 = arith.constant 0 : i32
    return %c0_i32, %arg1 : i32, i32
  }
  func.func @transform_3(%arg0: i32, %arg1: i32, %arg2: i32) -> (i32, i32) {
    %c0_i32 = arith.constant 0 : i32
    return %arg0, %arg1 : i32, i32
  }
}

module attributes {stable_mosaic.version = 11 : i64} {
  func.func @_linear_kernel(%arg0: i32, %arg1: i32, %arg2: i32, %arg3: memref<16x128xbf16, #tpu.memory_space<vmem>>, %arg4: memref<128x128xbf16, #tpu.memory_space<vmem>>, %arg5: memref<1x128xf32, #tpu.memory_space<vmem>>, %arg6: memref<16x128xf32, #tpu.memory_space<vmem>>, %arg7: memref<16x128xf32, #tpu.memory_space<vmem>>) attributes {dimension_semantics = [#tpu.dimension_semantics<parallel>, #tpu.dimension_semantics<parallel>, #tpu.dimension_semantics<arbitrary>], iteration_bounds = array<i64: 1, 1, 1>, scalar_prefetch = 0 : i64, scratch_operands = 1 : i64, tpu.core_type = #tpu.core_type<tc>, window_params = [{transform_indices = @transform_0, window_bounds = array<i64: 16, 128>}, {transform_indices = @transform_1, window_bounds = array<i64: 128, 128>}, {transform_indices = @transform_2, window_bounds = array<i64: 1, 128>}, {transform_indices = @transform_3, window_bounds = array<i64: 16, 128>}]} {
    %c0_i32 = arith.constant 0 : i32
    %0 = arith.cmpi eq, %arg2, %c0_i32 : i32
    %1 = arith.extui %0 : i1 to i32
    %c0_i32_0 = arith.constant 0 : i32
    %2 = arith.cmpi ne, %1, %c0_i32_0 : i32
    scf.if %2 {
      %cst_10 = arith.constant 0.000000e+00 : f32
      %12 = vector.broadcast %cst_10 : f32 to vector<16x128xf32>
      %c0_11 = arith.constant 0 : index
      %c0_12 = arith.constant 0 : index
      %13 = vector.load %arg7[%c0_11, %c0_12] : memref<16x128xf32, #tpu.memory_space<vmem>>, vector<16x128xf32>
      tpu.vector_store %arg7[%c0_11, %c0_12], %12 {strides = array<i32>} : memref<16x128xf32, #tpu.memory_space<vmem>>, vector<16x128xf32>,
    } else {
    }
    %c0 = arith.constant 0 : index
    %c0_1 = arith.constant 0 : index
    %3 = vector.load %arg7[%c0, %c0_1] : memref<16x128xf32, #tpu.memory_space<vmem>>, vector<16x128xf32>
    %c0_2 = arith.constant 0 : index
    %c0_3 = arith.constant 0 : index
    %4 = vector.load %arg3[%c0_2, %c0_3] : memref<16x128xbf16, #tpu.memory_space<vmem>>, vector<16x128xbf16>
    %c0_4 = arith.constant 0 : index
    %c0_5 = arith.constant 0 : index
    %5 = vector.load %arg4[%c0_4, %c0_5] : memref<128x128xbf16, #tpu.memory_space<vmem>>, vector<128x128xbf16>
    %cst = arith.constant dense<0.000000e+00> : vector<16x128xf32>
    %6 = tpu.matmul %4, %5, %cst {dimension_numbers = #tpu.dot_dimension_numbers<[1], [0], [0], [1], [0, 0, 1, 1], [], []>} : vector<16x128xbf16>, vector<128x128xbf16>, vector<16x128xf32> -> vector<16x128xf32>
    %7 = arith.addf %3, %6 : vector<16x128xf32>
    %c0_6 = arith.constant 0 : index
    %c0_7 = arith.constant 0 : index
    %8 = vector.load %arg7[%c0_6, %c0_7] : memref<16x128xf32, #tpu.memory_space<vmem>>, vector<16x128xf32>
    tpu.vector_store %arg7[%c0_6, %c0_7], %7 {strides = array<i32>} : memref<16x128xf32, #tpu.memory_space<vmem>>, vector<16x128xf32>,
    %c0_i32_8 = arith.constant 0 : i32
    %9 = arith.cmpi eq, %arg2, %c0_i32_8 : i32
    %10 = arith.extui %9 : i1 to i32
    %c0_i32_9 = arith.constant 0 : i32
    %11 = arith.cmpi ne, %10, %c0_i32_9 : i32
    scf.if %11 {
      %c0_10 = arith.constant 0 : index
      %c0_11 = arith.constant 0 : index
      %12 = vector.load %arg7[%c0_10, %c0_11] : memref<16x128xf32, #tpu.memory_space<vmem>>, vector<16x128xf32>
      %c0_12 = arith.constant 0 : index
      %c0_13 = arith.constant 0 : index
      %13 = vector.load %arg5[%c0_12, %c0_13] : memref<1x128xf32, #tpu.memory_space<vmem>>, vector<1x128xf32>
      %14 = vector.broadcast %13 : vector<1x128xf32> to vector<16x128xf32>
      %15 = arith.addf %12, %14 : vector<16x128xf32>
      %c0_14 = arith.constant 0 : index
      %c0_15 = arith.constant 0 : index
      %16 = vector.load %arg6[%c0_14, %c0_15] : memref<16x128xf32, #tpu.memory_space<vmem>>, vector<16x128xf32>
      tpu.vector_store %arg6[%c0_14, %c0_15], %15 {strides = array<i32>} : memref<16x128xf32, #tpu.memory_space<vmem>>, vector<16x128xf32>,
    } else {
    }
    return
  }
  func.func @transform_0(%arg0: i32, %arg1: i32, %arg2: i32) -> (i32, i32) {
    %c0_i32 = arith.constant 0 : i32
    return %arg0, %arg2 : i32, i32
  }
  func.func @transform_1(%arg0: i32, %arg1: i32, %arg2: i32) -> (i32, i32) {
    %c0_i32 = arith.constant 0 : i32
    return %arg2, %arg1 : i32, i32
  }
  func.func @transform_2(%arg0: i32, %arg1: i32, %arg2: i32) -> (i32, i32) {
    %c0_i32 = arith.constant 0 : i32
    %c0_i32_0 = arith.constant 0 : i32
    return %c0_i32, %arg1 : i32, i32
  }
  func.func @transform_3(%arg0: i32, %arg1: i32, %arg2: i32) -> (i32, i32) {
    %c0_i32 = arith.constant 0 : i32
    return %arg0, %arg1 : i32, i32
  }
}

module attributes {stable_mosaic.version = 11 : i64} {
  func.func @_attn_kernel(%arg0: i32, %arg1: i32, %arg2: i32, %arg3: memref<1x8x128xbf16, #tpu.memory_space<vmem>>, %arg4: memref<1x8x128xbf16, #tpu.memory_space<vmem>>, %arg5: memref<1x8x128xbf16, #tpu.memory_space<vmem>>, %arg6: memref<8x32xbf16, #tpu.memory_space<vmem>>, %arg7: memref<8x32xbf16, #tpu.memory_space<vmem>>, %arg8: memref<4x1x1xf32, #tpu.memory_space<vmem>>, %arg9: memref<1x8x128xbf16, #tpu.memory_space<vmem>>, %arg10: memref<4x8x1xf32, #tpu.memory_space<vmem>>, %arg11: memref<4x8x1xf32, #tpu.memory_space<vmem>>, %arg12: memref<4x8x32xf32, #tpu.memory_space<vmem>>) attributes {dimension_semantics = [#tpu.dimension_semantics<parallel>, #tpu.dimension_semantics<parallel>, #tpu.dimension_semantics<arbitrary>], iteration_bounds = array<i64: 2, 1, 1>, scalar_prefetch = 0 : i64, scratch_operands = 3 : i64, tpu.core_type = #tpu.core_type<tc>, window_params = [{transform_indices = @transform_0, window_bounds = array<i64: 1, 8, 128>}, {transform_indices = @transform_1, window_bounds = array<i64: 1, 8, 128>}, {transform_indices = @transform_2, window_bounds = array<i64: 1, 8, 128>}, {transform_indices = @transform_3, window_bounds = array<i64: 8, 32>}, {transform_indices = @transform_4, window_bounds = array<i64: 8, 32>}, {pipeline_mode = #tpu.pipeline_mode<synchronous>, transform_indices = @transform_5, window_bounds = array<i64: 4, 1, 1>}, {transform_indices = @transform_6, window_bounds = array<i64: 1, 8, 128>}]} {
    %c0_i32 = arith.constant 0 : i32
    %0 = arith.cmpi eq, %arg2, %c0_i32 : i32
    %1 = arith.extui %0 : i1 to i32
    %c0_i32_0 = arith.constant 0 : i32
    %2 = arith.cmpi ne, %1, %c0_i32_0 : i32
    scf.if %2 {
      %cst_64 = arith.constant 0xFF800000 : f32
      %78 = vector.broadcast %cst_64 : f32 to vector<4x8x1xf32>
      %c0_65 = arith.constant 0 : index
      %c0_66 = arith.constant 0 : index
      %c0_67 = arith.constant 0 : index
      %79 = vector.load %arg10[%c0_65, %c0_66, %c0_67] : memref<4x8x1xf32, #tpu.memory_space<vmem>>, vector<4x8x1xf32>
      tpu.vector_store %arg10[%c0_65, %c0_66, %c0_67], %78 {strides = array<i32>} : memref<4x8x1xf32, #tpu.memory_space<vmem>>, vector<4x8x1xf32>,
      %cst_68 = arith.constant 0.000000e+00 : f32
      %80 = vector.broadcast %cst_68 : f32 to vector<4x8x1xf32>
      %c0_69 = arith.constant 0 : index
      %c0_70 = arith.constant 0 : index
      %c0_71 = arith.constant 0 : index
      %81 = vector.load %arg11[%c0_69, %c0_70, %c0_71] : memref<4x8x1xf32, #tpu.memory_space<vmem>>, vector<4x8x1xf32>
      tpu.vector_store %arg11[%c0_69, %c0_70, %c0_71], %80 {strides = array<i32>} : memref<4x8x1xf32, #tpu.memory_space<vmem>>, vector<4x8x1xf32>,
      %cst_72 = arith.constant 0.000000e+00 : f32
      %82 = vector.broadcast %cst_72 : f32 to vector<4x8x32xf32>
      %c0_73 = arith.constant 0 : index
      %c0_74 = arith.constant 0 : index
      %c0_75 = arith.constant 0 : index
      %83 = vector.load %arg12[%c0_73, %c0_74, %c0_75] : memref<4x8x32xf32, #tpu.memory_space<vmem>>, vector<4x8x32xf32>
      tpu.vector_store %arg12[%c0_73, %c0_74, %c0_75], %82 {strides = array<i32>} : memref<4x8x32xf32, #tpu.memory_space<vmem>>, vector<4x8x32xf32>,
    } else {
    }
    %c0 = arith.constant 0 : index
    %c0_1 = arith.constant 0 : index
    %c0_2 = arith.constant 0 : index
    %3 = vector.load %arg3[%c0, %c0_1, %c0_2] : memref<1x8x128xbf16, #tpu.memory_space<vmem>>, vector<1x8x32xbf16>
    %4 = vector.shape_cast %3 : vector<1x8x32xbf16> to vector<8x32xbf16>
    %c0_3 = arith.constant 0 : index
    %c0_4 = arith.constant 0 : index
    %c32 = arith.constant 32 : index
    %5 = vector.load %arg3[%c0_3, %c0_4, %c32] : memref<1x8x128xbf16, #tpu.memory_space<vmem>>, vector<1x8x32xbf16>
    %6 = vector.shape_cast %5 : vector<1x8x32xbf16> to vector<8x32xbf16>
    %c0_5 = arith.constant 0 : index
    %c0_6 = arith.constant 0 : index
    %c64 = arith.constant 64 : index
    %7 = vector.load %arg3[%c0_5, %c0_6, %c64] : memref<1x8x128xbf16, #tpu.memory_space<vmem>>, vector<1x8x32xbf16>
    %8 = vector.shape_cast %7 : vector<1x8x32xbf16> to vector<8x32xbf16>
    %c0_7 = arith.constant 0 : index
    %c0_8 = arith.constant 0 : index
    %c96 = arith.constant 96 : index
    %9 = vector.load %arg3[%c0_7, %c0_8, %c96] : memref<1x8x128xbf16, #tpu.memory_space<vmem>>, vector<1x8x32xbf16>
    %10 = vector.shape_cast %9 : vector<1x8x32xbf16> to vector<8x32xbf16>
    %11 = vector.shape_cast %4 : vector<8x32xbf16> to vector<1x8x32xbf16>
    %12 = vector.shape_cast %6 : vector<8x32xbf16> to vector<1x8x32xbf16>
    %13 = vector.shape_cast %8 : vector<8x32xbf16> to vector<1x8x32xbf16>
    %14 = vector.shape_cast %10 : vector<8x32xbf16> to vector<1x8x32xbf16>
    %15 = tpu.concatenate %11, %12, %13, %14 in 0 : vector<1x8x32xbf16>, vector<1x8x32xbf16>, vector<1x8x32xbf16>, vector<1x8x32xbf16> -> vector<4x8x32xbf16>
    %c0_9 = arith.constant 0 : index
    %c0_10 = arith.constant 0 : index
    %c0_11 = arith.constant 0 : index
    %16 = vector.load %arg4[%c0_9, %c0_10, %c0_11] : memref<1x8x128xbf16, #tpu.memory_space<vmem>>, vector<1x8x32xbf16>
    %17 = vector.shape_cast %16 : vector<1x8x32xbf16> to vector<8x32xbf16>
    %c0_12 = arith.constant 0 : index
    %c0_13 = arith.constant 0 : index
    %c32_14 = arith.constant 32 : index
    %18 = vector.load %arg4[%c0_12, %c0_13, %c32_14] : memref<1x8x128xbf16, #tpu.memory_space<vmem>>, vector<1x8x32xbf16>
    %19 = vector.shape_cast %18 : vector<1x8x32xbf16> to vector<8x32xbf16>
    %c0_15 = arith.constant 0 : index
    %c0_16 = arith.constant 0 : index
    %c64_17 = arith.constant 64 : index
    %20 = vector.load %arg4[%c0_15, %c0_16, %c64_17] : memref<1x8x128xbf16, #tpu.memory_space<vmem>>, vector<1x8x32xbf16>
    %21 = vector.shape_cast %20 : vector<1x8x32xbf16> to vector<8x32xbf16>
    %c0_18 = arith.constant 0 : index
    %c0_19 = arith.constant 0 : index
    %c96_20 = arith.constant 96 : index
    %22 = vector.load %arg4[%c0_18, %c0_19, %c96_20] : memref<1x8x128xbf16, #tpu.memory_space<vmem>>, vector<1x8x32xbf16>
    %23 = vector.shape_cast %22 : vector<1x8x32xbf16> to vector<8x32xbf16>
    %24 = vector.shape_cast %17 : vector<8x32xbf16> to vector<1x8x32xbf16>
    %25 = vector.shape_cast %19 : vector<8x32xbf16> to vector<1x8x32xbf16>
    %26 = vector.shape_cast %21 : vector<8x32xbf16> to vector<1x8x32xbf16>
    %27 = vector.shape_cast %23 : vector<8x32xbf16> to vector<1x8x32xbf16>
    %28 = tpu.concatenate %24, %25, %26, %27 in 0 : vector<1x8x32xbf16>, vector<1x8x32xbf16>, vector<1x8x32xbf16>, vector<1x8x32xbf16> -> vector<4x8x32xbf16>
    %c0_21 = arith.constant 0 : index
    %c0_22 = arith.constant 0 : index
    %c0_23 = arith.constant 0 : index
    %29 = vector.load %arg5[%c0_21, %c0_22, %c0_23] : memref<1x8x128xbf16, #tpu.memory_space<vmem>>, vector<1x8x32xbf16>
    %30 = vector.shape_cast %29 : vector<1x8x32xbf16> to vector<8x32xbf16>
    %c0_24 = arith.constant 0 : index
    %c0_25 = arith.constant 0 : index
    %c32_26 = arith.constant 32 : index
    %31 = vector.load %arg5[%c0_24, %c0_25, %c32_26] : memref<1x8x128xbf16, #tpu.memory_space<vmem>>, vector<1x8x32xbf16>
    %32 = vector.shape_cast %31 : vector<1x8x32xbf16> to vector<8x32xbf16>
    %c0_27 = arith.constant 0 : index
    %c0_28 = arith.constant 0 : index
    %c64_29 = arith.constant 64 : index
    %33 = vector.load %arg5[%c0_27, %c0_28, %c64_29] : memref<1x8x128xbf16, #tpu.memory_space<vmem>>, vector<1x8x32xbf16>
    %34 = vector.shape_cast %33 : vector<1x8x32xbf16> to vector<8x32xbf16>
    %c0_30 = arith.constant 0 : index
    %c0_31 = arith.constant 0 : index
    %c96_32 = arith.constant 96 : index
    %35 = vector.load %arg5[%c0_30, %c0_31, %c96_32] : memref<1x8x128xbf16, #tpu.memory_space<vmem>>, vector<1x8x32xbf16>
    %36 = vector.shape_cast %35 : vector<1x8x32xbf16> to vector<8x32xbf16>
    %37 = vector.shape_cast %30 : vector<8x32xbf16> to vector<1x8x32xbf16>
    %38 = vector.shape_cast %32 : vector<8x32xbf16> to vector<1x8x32xbf16>
    %39 = vector.shape_cast %34 : vector<8x32xbf16> to vector<1x8x32xbf16>
    %40 = vector.shape_cast %36 : vector<8x32xbf16> to vector<1x8x32xbf16>
    %41 = tpu.concatenate %37, %38, %39, %40 in 0 : vector<1x8x32xbf16>, vector<1x8x32xbf16>, vector<1x8x32xbf16>, vector<1x8x32xbf16> -> vector<4x8x32xbf16>
    %cst = arith.constant dense<0.000000e+00> : vector<4x8x8xf32>
    %42 = tpu.matmul %15, %28, %cst {dimension_numbers = #tpu.dot_dimension_numbers<[2], [2], [1], [1], [0, 0, 0, 1, 1, 1], [0], [0]>} : vector<4x8x32xbf16>, vector<4x8x32xbf16>, vector<4x8x8xf32> -> vector<4x8x8xf32>
    %c0_33 = arith.constant 0 : index
    %c0_34 = arith.constant 0 : index
    %43 = vector.load %arg6[%c0_33, %c0_34] : memref<8x32xbf16, #tpu.memory_space<vmem>>, vector<8x32xbf16>
    %c0_35 = arith.constant 0 : index
    %c0_36 = arith.constant 0 : index
    %44 = vector.load %arg7[%c0_35, %c0_36] : memref<8x32xbf16, #tpu.memory_space<vmem>>, vector<8x32xbf16>
    %cst_37 = arith.constant dense<0.000000e+00> : vector<8x8xf32>
    %45 = tpu.matmul %43, %44, %cst_37 {dimension_numbers = #tpu.dot_dimension_numbers<[1], [1], [0], [0], [0, 0, 1, 0], [], []>} : vector<8x32xbf16>, vector<8x32xbf16>, vector<8x8xf32> -> vector<8x8xf32>
    %c0_38 = arith.constant 0 : index
    %c0_39 = arith.constant 0 : index
    %c0_40 = arith.constant 0 : index
    %46 = vector.load %arg8[%c0_38, %c0_39, %c0_40] : memref<4x1x1xf32, #tpu.memory_space<vmem>>, vector<4x1x1xf32>
    %47 = vector.shape_cast %45 : vector<8x8xf32> to vector<1x8x8xf32>
    %48 = vector.broadcast %46 : vector<4x1x1xf32> to vector<4x8x8xf32>
    %49 = vector.broadcast %47 : vector<1x8x8xf32> to vector<4x8x8xf32>
    %50 = arith.mulf %48, %49 : vector<4x8x8xf32>
    %51 = arith.addf %42, %50 : vector<4x8x8xf32>
    %c0_41 = arith.constant 0 : index
    %c0_42 = arith.constant 0 : index
    %c0_43 = arith.constant 0 : index
    %52 = vector.load %arg10[%c0_41, %c0_42, %c0_43] : memref<4x8x1xf32, #tpu.memory_space<vmem>>, vector<4x8x1xf32>
    %cst_44 = arith.constant dense<0xFF800000> : vector<4x8xf32>
    %53 = vector.multi_reduction <maximumf>, %51, %cst_44 [2] : vector<4x8x8xf32> to vector<4x8xf32>
    %54 = vector.shape_cast %53 : vector<4x8xf32> to vector<4x8x1xf32>
    %55 = arith.maximumf %52, %54 : vector<4x8x1xf32>
    %56 = arith.subf %52, %55 : vector<4x8x1xf32>
    %57 = math.exp %56 : vector<4x8x1xf32>
    %58 = vector.broadcast %55 : vector<4x8x1xf32> to vector<4x8x8xf32>
    %59 = arith.subf %51, %58 : vector<4x8x8xf32>
    %60 = math.exp %59 : vector<4x8x8xf32>
    %c0_45 = arith.constant 0 : index
    %c0_46 = arith.constant 0 : index
    %c0_47 = arith.constant 0 : index
    %61 = vector.load %arg11[%c0_45, %c0_46, %c0_47] : memref<4x8x1xf32, #tpu.memory_space<vmem>>, vector<4x8x1xf32>
    %62 = arith.mulf %57, %61 : vector<4x8x1xf32>
    %cst_48 = arith.constant dense<0.000000e+00> : vector<4x8xf32>
    %63 = vector.multi_reduction <add>, %60, %cst_48 [2] : vector<4x8x8xf32> to vector<4x8xf32>
    %64 = vector.shape_cast %63 : vector<4x8xf32> to vector<4x8x1xf32>
    %65 = arith.addf %62, %64 : vector<4x8x1xf32>
    %c0_49 = arith.constant 0 : index
    %c0_50 = arith.constant 0 : index
    %c0_51 = arith.constant 0 : index
    %66 = vector.load %arg11[%c0_49, %c0_50, %c0_51] : memref<4x8x1xf32, #tpu.memory_space<vmem>>, vector<4x8x1xf32>
    tpu.vector_store %arg11[%c0_49, %c0_50, %c0_51], %65 {strides = array<i32>} : memref<4x8x1xf32, #tpu.memory_space<vmem>>, vector<4x8x1xf32>,
    %67 = arith.truncf %60 : vector<4x8x8xf32> to vector<4x8x8xbf16>
    %cst_52 = arith.constant dense<0.000000e+00> : vector<4x8x32xf32>
    %68 = tpu.matmul %67, %41, %cst_52 {dimension_numbers = #tpu.dot_dimension_numbers<[2], [1], [1], [2], [0, 0, 0, 1, 1, 2], [0], [0]>} : vector<4x8x8xbf16>, vector<4x8x32xbf16>, vector<4x8x32xf32> -> vector<4x8x32xf32>
    %c0_53 = arith.constant 0 : index
    %c0_54 = arith.constant 0 : index
    %c0_55 = arith.constant 0 : index
    %69 = vector.load %arg12[%c0_53, %c0_54, %c0_55] : memref<4x8x32xf32, #tpu.memory_space<vmem>>, vector<4x8x32xf32>
    %70 = vector.broadcast %57 : vector<4x8x1xf32> to vector<4x8x32xf32>
    %71 = arith.mulf %70, %69 : vector<4x8x32xf32>
    %72 = arith.addf %71, %68 : vector<4x8x32xf32>
    %c0_56 = arith.constant 0 : index
    %c0_57 = arith.constant 0 : index
    %c0_58 = arith.constant 0 : index
    %73 = vector.load %arg12[%c0_56, %c0_57, %c0_58] : memref<4x8x32xf32, #tpu.memory_space<vmem>>, vector<4x8x32xf32>
    tpu.vector_store %arg12[%c0_56, %c0_57, %c0_58], %72 {strides = array<i32>} : memref<4x8x32xf32, #tpu.memory_space<vmem>>, vector<4x8x32xf32>,
    %c0_59 = arith.constant 0 : index
    %c0_60 = arith.constant 0 : index
    %c0_61 = arith.constant 0 : index
    %74 = vector.load %arg10[%c0_59, %c0_60, %c0_61] : memref<4x8x1xf32, #tpu.memory_space<vmem>>, vector<4x8x1xf32>
    tpu.vector_store %arg10[%c0_59, %c0_60, %c0_61], %55 {strides = array<i32>} : memref<4x8x1xf32, #tpu.memory_space<vmem>>, vector<4x8x1xf32>,
    %c0_i32_62 = arith.constant 0 : i32
    %75 = arith.cmpi eq, %arg2, %c0_i32_62 : i32
    %76 = arith.extui %75 : i1 to i32
    %c0_i32_63 = arith.constant 0 : i32
    %77 = arith.cmpi ne, %76, %c0_i32_63 : i32
    scf.if %77 {
      %c0_64 = arith.constant 0 : index
      %c0_65 = arith.constant 0 : index
      %c0_66 = arith.constant 0 : index
      %78 = vector.load %arg12[%c0_64, %c0_65, %c0_66] : memref<4x8x32xf32, #tpu.memory_space<vmem>>, vector<4x8x32xf32>
      %c0_67 = arith.constant 0 : index
      %c0_68 = arith.constant 0 : index
      %c0_69 = arith.constant 0 : index
      %79 = vector.load %arg11[%c0_67, %c0_68, %c0_69] : memref<4x8x1xf32, #tpu.memory_space<vmem>>, vector<4x8x1xf32>
      %80 = vector.broadcast %79 : vector<4x8x1xf32> to vector<4x8x32xf32>
      %81 = arith.divf %78, %80 : vector<4x8x32xf32>
      %82 = vector.extract_strided_slice %81 {offsets = [0, 0, 0], sizes = [1, 8, 32], strides = [1, 1, 1]} : vector<4x8x32xf32> to vector<1x8x32xf32>
      %83 = vector.shape_cast %82 : vector<1x8x32xf32> to vector<8x32xf32>
      %84 = vector.extract_strided_slice %81 {offsets = [1, 0, 0], sizes = [1, 8, 32], strides = [1, 1, 1]} : vector<4x8x32xf32> to vector<1x8x32xf32>
      %85 = vector.shape_cast %84 : vector<1x8x32xf32> to vector<8x32xf32>
      %86 = vector.extract_strided_slice %81 {offsets = [2, 0, 0], sizes = [1, 8, 32], strides = [1, 1, 1]} : vector<4x8x32xf32> to vector<1x8x32xf32>
      %87 = vector.shape_cast %86 : vector<1x8x32xf32> to vector<8x32xf32>
      %88 = vector.extract_strided_slice %81 {offsets = [3, 0, 0], sizes = [1, 8, 32], strides = [1, 1, 1]} : vector<4x8x32xf32> to vector<1x8x32xf32>
      %89 = vector.shape_cast %88 : vector<1x8x32xf32> to vector<8x32xf32>
      %90 = tpu.concatenate %83, %85, %87, %89 in 1 : vector<8x32xf32>, vector<8x32xf32>, vector<8x32xf32>, vector<8x32xf32> -> vector<8x128xf32>
      %91 = arith.truncf %90 : vector<8x128xf32> to vector<8x128xbf16>
      %c0_70 = arith.constant 0 : index
      %c0_71 = arith.constant 0 : index
      %c0_72 = arith.constant 0 : index
      %92 = vector.load %arg9[%c0_70, %c0_71, %c0_72] : memref<1x8x128xbf16, #tpu.memory_space<vmem>>, vector<1x8x128xbf16>
      %93 = vector.shape_cast %92 : vector<1x8x128xbf16> to vector<8x128xbf16>
      %94 = vector.shape_cast %91 : vector<8x128xbf16> to vector<1x8x128xbf16>
      tpu.vector_store %arg9[%c0_70, %c0_71, %c0_72], %94 {strides = array<i32>} : memref<1x8x128xbf16, #tpu.memory_space<vmem>>, vector<1x8x128xbf16>,
    } else {
    }
    return
  }
  func.func @transform_0(%arg0: i32, %arg1: i32, %arg2: i32) -> (i32, i32, i32) {
    %c0_i32 = arith.constant 0 : i32
    %c0_i32_0 = arith.constant 0 : i32
    return %arg0, %arg1, %c0_i32 : i32, i32, i32
  }
  func.func @transform_1(%arg0: i32, %arg1: i32, %arg2: i32) -> (i32, i32, i32) {
    %c1_i32 = arith.constant 1 : i32
    %c0_i32 = arith.constant 0 : i32
    return %arg0, %arg2, %c1_i32 : i32, i32, i32
  }
  func.func @transform_2(%arg0: i32, %arg1: i32, %arg2: i32) -> (i32, i32, i32) {
    %c2_i32 = arith.constant 2 : i32
    %c0_i32 = arith.constant 0 : i32
    return %arg0, %arg2, %c2_i32 : i32, i32, i32
  }
  func.func @transform_3(%arg0: i32, %arg1: i32, %arg2: i32) -> (i32, i32) {
    %c0_i32 = arith.constant 0 : i32
    %c0_i32_0 = arith.constant 0 : i32
    return %arg1, %c0_i32 : i32, i32
  }
  func.func @transform_4(%arg0: i32, %arg1: i32, %arg2: i32) -> (i32, i32) {
    %c0_i32 = arith.constant 0 : i32
    %c0_i32_0 = arith.constant 0 : i32
    return %arg2, %c0_i32 : i32, i32
  }
  func.func @transform_5(%arg0: i32, %arg1: i32, %arg2: i32) -> (i32, i32, i32) {
    %c0_i32 = arith.constant 0 : i32
    %c0_i32_0 = arith.constant 0 : i32
    %c0_i32_1 = arith.constant 0 : i32
    %c0_i32_2 = arith.constant 0 : i32
    return %c0_i32, %c0_i32_0, %c0_i32_1 : i32, i32, i32
  }
  func.func @transform_6(%arg0: i32, %arg1: i32, %arg2: i32) -> (i32, i32, i32) {
    %c0_i32 = arith.constant 0 : i32
    %c0_i32_0 = arith.constant 0 : i32
    return %arg0, %arg1, %c0_i32 : i32, i32, i32
  }
}

</mosaic_0001>

<llo_original>
// kernel: disentangled_attention.3
$region0: #{disentangled_attention.3}
  #allocation0 [shape = 'u32[]', space=smem, size = 0x4, offset = 0x4, fixed_abs, tag = 'smem constant byte address 0x4 - core index']
  #allocation1 [shape = 'u32[144,128]{1,0:T(1,128)}', space=vmem, size = 0x12000, scoped, tag = 'internal scratch']
  #allocation2 [shape = 'f32[16,384]{1,0:T(8,128)}', space=vmem, size = 0x6000, scoped, tag = 'scratch operand']
  %s0 = inlined_call_operand.vmem [shape: bf16[16,128], index: 0, kind: input, shape index: {}]
  %s1 = inlined_call_operand.hbm [shape: bf16[128,384], index: 1, kind: input, shape index: {}]
  %s2 = inlined_call_operand.vmem [shape: f32[1,384], index: 2, kind: input, shape index: {}]
  %s3 = inlined_call_operand.vmem [shape: bf16[16,384], index: 3, kind: output, shape index: {}]
  %s4 = sld [smem:[#allocation0]]
  $region34: #{disentangled_attention.3} parent=0
    _
  %s6 = ssub.s32 1, %s4
  %s7 = scalar_select 0, %s6, %s4
  $region1: #{disentangled_attention.3} parent=0
    #allocation3 [shape = 'u8[98304]{0}', space=vmem, size = 0x18000, scoped, tag = 'input window, operand 1, single buffered']
    #allocation4 [shape = 's32[1]{0}', space=sflag, size = 0x4, scoped, tag = 'scoped memory for disentangled_attention.3']
    %8 = vsyncpa [#allocation4], 0
    // Predicated region
    $region2: #{disentangled_attention.3} parent=1 // pred_check
      _
    $region3: #{disentangled_attention.3} parent=1 // pred_check_branch
      %10 = sbr.rel (0) target = $region5
    $region4: #{disentangled_attention.3} parent=1 // pred_region
      _
    $region5: #{disentangled_attention.3} parent=1 // pred_fallthru
      _
    // Predicated region
    $region6: #{disentangled_attention.3} parent=1 // pred_check
      _
    $region7: #{disentangled_attention.3} parent=1 // pred_check_branch
      %12 = sbr.rel (0) target = $region9
    $region8: #{disentangled_attention.3} parent=1 // pred_region
      %s14 = ssub.s32 3072, 3072
      %15 = vsyncadd [#allocation4], %s14
      %s16 = sshll.u32 [#allocation3], 4
      %s17 = int_to_ptr.vmem [resolvable:$true] %s16
      %22 = dma.hbm_to_vmem [thread:$0]  %s1, 3072, %s17, [#allocation4], 192, 192, 12
    $region9: #{disentangled_attention.3} parent=1 // pred_fallthru
      _
    // Predicated region
    $region10: #{disentangled_attention.3} parent=1 // pred_check
      _
    $region11: #{disentangled_attention.3} parent=1 // pred_check_branch
      %24 = sbr.rel (0) target = $region13
    $region12: #{disentangled_attention.3} parent=1 // pred_region
      _
    $region13: #{disentangled_attention.3} parent=1 // pred_fallthru
      _
    // Predicated region
    $region14: #{disentangled_attention.3} parent=1 // pred_check
      _
    $region15: #{disentangled_attention.3} parent=1 // pred_check_branch
      %26 = sbr.rel (0) target = $region17
    $region16: #{disentangled_attention.3} parent=1 // pred_region
      %27 = dma.done [#allocation4], 3072
    $region17: #{disentangled_attention.3} parent=1 // pred_fallthru
      _
    %p29 = scmp.eq.s32.totalorder 0, 0
    // Predicated region
    $region18: #{disentangled_attention.3} parent=1 // pred_check
      %p30 = pneg %p29
    $region19: #{disentangled_attention.3} parent=1 // pred_check_branch
      %32 = sbr.rel (%p30) target = $region21
    $region20: #{disentangled_attention.3} parent=1 // pred_region
      %33 = vst [vmem:[#allocation2] sm:$0xff] 0.0
      %34 = vst [vmem:[#allocation2 + $0x8] sm:$0xff] 0.0
      %35 = vst [vmem:[#allocation2 + $0x10] sm:$0xff] 0.0
      %36 = vst [vmem:[#allocation2 + $0x18] sm:$0xff] 0.0
      %37 = vst [vmem:[#allocation2 + $0x20] sm:$0xff] 0.0
      %38 = vst [vmem:[#allocation2 + $0x28] sm:$0xff] 0.0
    $region21: #{disentangled_attention.3} parent=1 // pred_fallthru
      _
    %v39 = vld [vmem:[#allocation2] sm:$0xff]
    %v40 = vld [vmem:[#allocation2 + $0x8] sm:$0xff]
    %v41 = vld [vmem:[#allocation2 + $0x10] sm:$0xff]
    %v42 = vld [vmem:[#allocation2 + $0x18] sm:$0xff]
    %v43 = vld [vmem:[#allocation2 + $0x20] sm:$0xff]
    %v44 = vld [vmem:[#allocation2 + $0x28] sm:$0xff]
    %v45 = vld [vmem:[%s0] sm:$0xf]
    %v46 = vld [vmem:[%s0 + $0x4] sm:$0xf]
    %v47 = vld [vmem:[#allocation3] sm:$0xff]
    %v48 = vld [vmem:[#allocation3 + $0x8] sm:$0xf]
    %v49 = vld [vmem:[#allocation3 + $0xc] sm:$0xff]
    %v50 = vld [vmem:[#allocation3 + $0x14] sm:$0xf]
    %v51 = vld [vmem:[#allocation3 + $0x18] sm:$0xff]
    %v52 = vld [vmem:[#allocation3 + $0x20] sm:$0xf]
    %v53 = vld [vmem:[#allocation3 + $0x24] sm:$0xff]
    %v54 = vld [vmem:[#allocation3 + $0x2c] sm:$0xf]
    %v55 = vld [vmem:[#allocation3 + $0x30] sm:$0xff]
    %v56 = vld [vmem:[#allocation3 + $0x38] sm:$0xf]
    %v57 = vld [vmem:[#allocation3 + $0x3c] sm:$0xff]
    %v58 = vld [vmem:[#allocation3 + $0x44] sm:$0xf]
    %v59 = vld [vmem:[#allocation3 + $0x48] sm:$0xff]
    %v60 = vld [vmem:[#allocation3 + $0x50] sm:$0xf]
    %v61 = vld [vmem:[#allocation3 + $0x54] sm:$0xff]
    %v62 = vld [vmem:[#allocation3 + $0x5c] sm:$0xf]
    %v63 = vld [vmem:[#allocation3 + $0x60] sm:$0xff]
    %v64 = vld [vmem:[#allocation3 + $0x68] sm:$0xf]
    %v65 = vld [vmem:[#allocation3 + $0x6c] sm:$0xff]
    %v66 = vld [vmem:[#allocation3 + $0x74] sm:$0xf]
    %v67 = vld [vmem:[#allocation3 + $0x78] sm:$0xff]
    %v68 = vld [vmem:[#allocation3 + $0x80] sm:$0xf]
    %v69 = vld [vmem:[#allocation3 + $0x84] sm:$0xff]
    %v70 = vld [vmem:[#allocation3 + $0x8c] sm:$0xf]
    %v71 = vld [vmem:[#allocation3 + $0x90] sm:$0xff]
    %v72 = vld [vmem:[#allocation3 + $0x98] sm:$0xf]
    %v73 = vld [vmem:[#allocation3 + $0x9c] sm:$0xff]
    %v74 = vld [vmem:[#allocation3 + $0xa4] sm:$0xf]
    %v75 = vld [vmem:[#allocation3 + $0xa8] sm:$0xff]
    %v76 = vld [vmem:[#allocation3 + $0xb0] sm:$0xf]
    %v77 = vld [vmem:[#allocation3 + $0xb4] sm:$0xff]
    %v78 = vld [vmem:[#allocation3 + $0xbc] sm:$0xf]
    %v81 = vunpack.c.l.b16 %v45
    %v82 = vunpack.c.l.b16 %v46
    %v83 = vpack.c.b16 %v82, %v81
    %v117 = vunpack.c.l.b16 %v47
    %v118 = vunpack.c.h.b16 %v47
    %v119 = vunpack.c.l.b16 %v48
    %v120 = vunpack.c.l.b16 %v49
    %v121 = vunpack.c.h.b16 %v49
    %v122 = vunpack.c.l.b16 %v50
    %v123 = vunpack.c.l.b16 %v51
    %v124 = vunpack.c.h.b16 %v51
    %v125 = vunpack.c.l.b16 %v52
    %v126 = vunpack.c.l.b16 %v53
    %v127 = vunpack.c.h.b16 %v53
    %v128 = vunpack.c.l.b16 %v54
    %v129 = vunpack.c.l.b16 %v55
    %v130 = vunpack.c.h.b16 %v55
    %v131 = vunpack.c.l.b16 %v56
    %v132 = vunpack.c.l.b16 %v57
    %v133 = vunpack.c.h.b16 %v57
    %v134 = vunpack.c.l.b16 %v58
    %v135 = vunpack.c.l.b16 %v59
    %v136 = vunpack.c.h.b16 %v59
    %v137 = vunpack.c.l.b16 %v60
    %v138 = vunpack.c.l.b16 %v61
    %v139 = vunpack.c.h.b16 %v61
    %v140 = vunpack.c.l.b16 %v62
    %v141 = vunpack.c.l.b16 %v63
    %v142 = vunpack.c.h.b16 %v63
    %v143 = vunpack.c.l.b16 %v64
    %v144 = vunpack.c.l.b16 %v65
    %v145 = vunpack.c.h.b16 %v65
    %v146 = vunpack.c.l.b16 %v66
    %v147 = vunpack.c.l.b16 %v67
    %v148 = vunpack.c.h.b16 %v67
    %v149 = vunpack.c.l.b16 %v68
    %v150 = vunpack.c.l.b16 %v69
    %v151 = vunpack.c.h.b16 %v69
    %v152 = vunpack.c.l.b16 %v70
    %v153 = vunpack.c.l.b16 %v71
    %v154 = vunpack.c.h.b16 %v71
    %v155 = vunpack.c.l.b16 %v72
    %v156 = vunpack.c.l.b16 %v73
    %v157 = vunpack.c.h.b16 %v73
    %v158 = vunpack.c.l.b16 %v74
    %v159 = vunpack.c.l.b16 %v75
    %v160 = vunpack.c.h.b16 %v75
    %v161 = vunpack.c.l.b16 %v76
    %v162 = vunpack.c.l.b16 %v77
    %v163 = vunpack.c.h.b16 %v77
    %v164 = vunpack.c.l.b16 %v78
    %v165 = vpack.c.b16 %v120, %v117
    %v166 = vpack.c.b16 %v121, %v118
    %v167 = vpack.c.b16 %v122, %v119
    %v168 = vpack.c.b16 %v126, %v123
    %v169 = vpack.c.b16 %v127, %v124
    %v170 = vpack.c.b16 %v128, %v125
    %v171 = vpack.c.b16 %v132, %v129
    %v172 = vpack.c.b16 %v133, %v130
    %v173 = vpack.c.b16 %v134, %v131
    %v174 = vpack.c.b16 %v138, %v135
    %v175 = vpack.c.b16 %v139, %v136
    %v176 = vpack.c.b16 %v140, %v137
    %v177 = vpack.c.b16 %v144, %v141
    %v178 = vpack.c.b16 %v145, %v142
    %v179 = vpack.c.b16 %v146, %v143
    %v180 = vpack.c.b16 %v150, %v147
    %v181 = vpack.c.b16 %v151, %v148
    %v182 = vpack.c.b16 %v152, %v149
    %v183 = vpack.c.b16 %v156, %v153
    %v184 = vpack.c.b16 %v157, %v154
    %v185 = vpack.c.b16 %v158, %v155
    %v186 = vpack.c.b16 %v162, %v159
    %v187 = vpack.c.b16 %v163, %v160
    %v188 = vpack.c.b16 %v164, %v161
    %213 = vmatprep.subr.bf16.mxu0 %v166
    %214 = vmatpush1.bf16.msra.mxu0 %v165
    %215 = vmatprep.subr.bf16.mxu0 %v169
    %216 = vmatpush1.bf16.msra.mxu0 %v168
    %217 = vmatprep.subr.bf16.mxu0 %v172
    %218 = vmatpush1.bf16.msra.mxu0 %v171
    %219 = vmatprep.subr.bf16.mxu0 %v175
    %220 = vmatpush1.bf16.msra.mxu0 %v174
    %221 = vmatprep.subr.bf16.mxu0 %v178
    %222 = vmatpush1.bf16.msra.mxu0 %v177
    %223 = vmatprep.subr.bf16.mxu0 %v181
    %224 = vmatpush1.bf16.msra.mxu0 %v180
    %225 = vmatprep.subr.bf16.mxu0 %v184
    %226 = vmatpush1.bf16.msra.mxu0 %v183
    %227 = vmatprep.subr.bf16.mxu0 %v187
    %228 = vmatpush1.bf16.msra.mxu0 %v186
    %229 = vmatprep.subr.bf16.mxu0 0
    %230 = vmatpush1.bf16.msra.mxu0 0
    %231 = vmatprep.subr.bf16.mxu0 0
    %232 = vmatpush1.bf16.msra.mxu0 0
    %233 = vmatprep.subr.bf16.mxu0 0
    %234 = vmatpush1.bf16.msra.mxu0 0
    %235 = vmatprep.subr.bf16.mxu0 0
    %236 = vmatpush1.bf16.msra.mxu0 0
    %237 = vmatprep.subr.bf16.mxu0 0
    %238 = vmatpush1.bf16.msra.mxu0 0
    %239 = vmatprep.subr.bf16.mxu0 0
    %240 = vmatpush1.bf16.msra.mxu0 0
    %241 = vmatprep.subr.bf16.mxu0 0
    %242 = vmatpush1.bf16.msra.mxu0 0
    %243 = vmatprep.subr.bf16.mxu0 0
    %244 = vmatpush1.bf16.msra.mxu0 0
    %245 = vmatprep.mubr.bf16.mxu0 0
    %246 = vmatmul.mubr.bf16.gmra.mrb[0].mxu0 %v83
    %v247 = vpop.f32.mrb[0].mxu0
    %v248 = vadd.f32 0.0, %v247
    %v249 = vpop.f32.mrb[0].mxu0
    %v250 = vadd.f32 0.0, %v249
    %v251 = vpop.f32.mrb[0].mxu0
    %v252 = vadd.f32 0.0, %v251
    %v253 = vpop.f32.mrb[0].mxu0
    %v254 = vadd.f32 0.0, %v253
    %255 = vdwg.mxu0
    %256 = vmatprep.subr.bf16.mxu0 0
    %257 = vmatpush1.bf16.msra.mxu0 %v167
    %258 = vmatprep.subr.bf16.mxu0 0
    %259 = vmatpush1.bf16.msra.mxu0 %v170
    %260 = vmatprep.subr.bf16.mxu0 0
    %261 = vmatpush1.bf16.msra.mxu0 %v173
    %262 = vmatprep.subr.bf16.mxu0 0
    %263 = vmatpush1.bf16.msra.mxu0 %v176
    %264 = vmatprep.subr.bf16.mxu0 0
    %265 = vmatpush1.bf16.msra.mxu0 %v179
    %266 = vmatprep.subr.bf16.mxu0 0
    %267 = vmatpush1.bf16.msra.mxu0 %v182
    %268 = vmatprep.subr.bf16.mxu0 0
    %269 = vmatpush1.bf16.msra.mxu0 %v185
    %270 = vmatprep.subr.bf16.mxu0 0
    %271 = vmatpush1.bf16.msra.mxu0 %v188
    %272 = vmatprep.subr.bf16.mxu0 0
    %273 = vmatpush1.bf16.msra.mxu0 0
    %274 = vmatprep.subr.bf16.mxu0 0
    %275 = vmatpush1.bf16.msra.mxu0 0
    %276 = vmatprep.subr.bf16.mxu0 0
    %277 = vmatpush1.bf16.msra.mxu0 0
    %278 = vmatprep.subr.bf16.mxu0 0
    %279 = vmatpush1.bf16.msra.mxu0 0
    %280 = vmatprep.subr.bf16.mxu0 0
    %281 = vmatpush1.bf16.msra.mxu0 0
    %282 = vmatprep.subr.bf16.mxu0 0
    %283 = vmatpush1.bf16.msra.mxu0 0
    %284 = vmatprep.subr.bf16.mxu0 0
    %285 = vmatpush1.bf16.msra.mxu0 0
    %286 = vmatprep.subr.bf16.mxu0 0
    %287 = vmatpush1.bf16.msra.mxu0 0
    %288 = vmatprep.mubr.bf16.mxu0 0
    %289 = vmatmul.mubr.bf16.gmra.mrb[0].mxu0 %v83
    %v290 = vpop.f32.mrb[0].mxu0
    %v291 = vadd.f32 0.0, %v290
    %v292 = vpop.f32.mrb[0].mxu0
    %v293 = vpop.f32.mrb[0].mxu0
    %v294 = vadd.f32 0.0, %v293
    %v295 = vpop.f32.mrb[0].mxu0
    %296 = vdwg.mxu0
    %v297 = vadd.f32 %v39, %v248
    %v298 = vadd.f32 %v40, %v250
    %v299 = vadd.f32 %v41, %v291
    %v300 = vadd.f32 %v42, %v252
    %v301 = vadd.f32 %v43, %v254
    %v302 = vadd.f32 %v44, %v294
    %303 = vst [vmem:[#allocation2] sm:$0xff] %v297
    %304 = vst [vmem:[#allocation2 + $0x8] sm:$0xff] %v298
    %305 = vst [vmem:[#allocation2 + $0x10] sm:$0xff] %v299
    %306 = vst [vmem:[#allocation2 + $0x18] sm:$0xff] %v300
    %307 = vst [vmem:[#allocation2 + $0x20] sm:$0xff] %v301
    %308 = vst [vmem:[#allocation2 + $0x28] sm:$0xff] %v302
    // Predicated region
    $region22: #{disentangled_attention.3} parent=1 // pred_check
      %p309 = pneg %p29
    $region23: #{disentangled_attention.3} parent=1 // pred_check_branch
      %311 = sbr.rel (%p309) target = $region25
    $region24: #{disentangled_attention.3} parent=1 // pred_region
      %v312 = vld [vmem:[#allocation2] sm:$0xff]
      %v313 = vld [vmem:[#allocation2 + $0x8] sm:$0xff]
      %v314 = vld [vmem:[#allocation2 + $0x10] sm:$0xff]
      %v315 = vld [vmem:[#allocation2 + $0x18] sm:$0xff]
      %v316 = vld [vmem:[#allocation2 + $0x20] sm:$0xff]
      %v317 = vld [vmem:[#allocation2 + $0x28] sm:$0xff]
      %v318 = vld [vmem:[%s2] sm:$0x7]
      %v320 = vlaneseq
      %v321 = vshrl.u32 %v320, 7
      %v322 = vsub.s32 0, %v321
      %v323 = vrot.slane %v318, %v322
      %v324 = vlaneseq
      %v325 = vshrl.u32 %v324, 7
      %v326 = vsub.s32 1, %v325
      %v327 = vrot.slane %v318, %v326
      %v328 = vlaneseq
      %v329 = vshrl.u32 %v328, 7
      %v330 = vsub.s32 2, %v329
      %v331 = vrot.slane %v318, %v330
      %v335 = vadd.f32 %v312, %v323
      %v336 = vadd.f32 %v313, %v327
      %v337 = vadd.f32 %v314, %v331
      %v338 = vadd.f32 %v315, %v323
      %v339 = vadd.f32 %v316, %v327
      %v340 = vadd.f32 %v317, %v331
      %v341 = vpack.c.bf16 %v338, %v335
      %v342 = vpack.c.bf16 %v339, %v336
      %v343 = vpack.c.bf16 %v340, %v337
      %v347 = vunpack.c.l.b16 %v341
      %v348 = vunpack.c.l.b16 %v342
      %v349 = vunpack.c.l.b16 %v343
      %v350 = vunpack.c.h.b16 %v341
      %v351 = vunpack.c.h.b16 %v342
      %v352 = vunpack.c.h.b16 %v343
      %v353 = vpack.c.b16 %v348, %v347
      %v354 = vpack.c.b16 %v349, %v349
      %v355 = vpack.c.b16 %v351, %v350
      %v356 = vpack.c.b16 %v352, %v352
      %361 = vst [vmem:[%s3] sm:$0xff] %v353
      %362 = vst [vmem:[%s3 + $0x8] sm:$0xf] %v354
      %363 = vst [vmem:[%s3 + $0xc] sm:$0xff] %v355
      %364 = vst [vmem:[%s3 + $0x14] sm:$0xf] %v356
    $region25: #{disentangled_attention.3} parent=1 // pred_fallthru
      _
    // Predicated region
    $region26: #{disentangled_attention.3} parent=1 // pred_check
      _
    $region27: #{disentangled_attention.3} parent=1 // pred_check_branch
      %366 = sbr.rel (0) target = $region29
    $region28: #{disentangled_attention.3} parent=1 // pred_region
      _
    $region29: #{disentangled_attention.3} parent=1 // pred_fallthru
      _
    // Predicated region
    $region30: #{disentangled_attention.3} parent=1 // pred_check
      _
    $region31: #{disentangled_attention.3} parent=1 // pred_check_branch
      %368 = sbr.rel (0) target = $region33
    $region32: #{disentangled_attention.3} parent=1 // pred_region
      _
    $region33: #{disentangled_attention.3} parent=1 // pred_fallthru
      _
    %369 = vsyncpa [#allocation4], 1

// kernel: disentangled_attention.5
$region0: #{disentangled_attention.5}
  #allocation0 [shape = 'u32[]', space=smem, size = 0x4, offset = 0x4, fixed_abs, tag = 'smem constant byte address 0x4 - core index']
  #allocation1 [shape = 'u32[144,128]{1,0:T(1,128)}', space=vmem, size = 0x12000, scoped, tag = 'internal scratch']
  #allocation2 [shape = 'f32[16,128]{1,0:T(8,128)}', space=vmem, size = 0x2000, scoped, tag = 'scratch operand']
  %s0 = inlined_call_operand.vmem [shape: bf16[16,128], index: 0, kind: input, shape index: {}]
  %s1 = inlined_call_operand.vmem [shape: bf16[128,128], index: 1, kind: input, shape index: {}]
  %s2 = inlined_call_operand.vmem [shape: f32[1,128], index: 2, kind: input, shape index: {}]
  %s3 = inlined_call_operand.hbm [shape: f32[16,128], index: 3, kind: output, shape index: {}]
  %s4 = sld [smem:[#allocation0]]
  $region30: #{disentangled_attention.5} parent=0
    _
  %s6 = ssub.s32 1, %s4
  %s7 = scalar_select 0, %s6, %s4
  $region1: #{disentangled_attention.5} parent=0
    #allocation3 [shape = 'u8[8192]{0}', space=vmem, size = 0x2000, scoped, tag = 'output window, operand 0, single buffered']
    #allocation4 [shape = 's32[1]{0}', space=sflag, size = 0x4, scoped, tag = 'scoped memory for disentangled_attention.5']
    %8 = vsyncpa [#allocation4], 0
    // Predicated region
    $region2: #{disentangled_attention.5} parent=1 // pred_check
      _
    $region3: #{disentangled_attention.5} parent=1 // pred_check_branch
      %10 = sbr.rel (0) target = $region5
    $region4: #{disentangled_attention.5} parent=1 // pred_region
      _
    $region5: #{disentangled_attention.5} parent=1 // pred_fallthru
      _
    // Predicated region
    $region6: #{disentangled_attention.5} parent=1 // pred_check
      _
    $region7: #{disentangled_attention.5} parent=1 // pred_check_branch
      %12 = sbr.rel (0) target = $region9
    $region8: #{disentangled_attention.5} parent=1 // pred_region
      _
    $region9: #{disentangled_attention.5} parent=1 // pred_fallthru
      _
    // Predicated region
    $region10: #{disentangled_attention.5} parent=1 // pred_check
      _
    $region11: #{disentangled_attention.5} parent=1 // pred_check_branch
      %14 = sbr.rel (0) target = $region13
    $region12: #{disentangled_attention.5} parent=1 // pred_region
      _
    $region13: #{disentangled_attention.5} parent=1 // pred_fallthru
      _
    %p16 = scmp.eq.s32.totalorder 0, 0
    // Predicated region
    $region14: #{disentangled_attention.5} parent=1 // pred_check
      %p17 = pneg %p16
    $region15: #{disentangled_attention.5} parent=1 // pred_check_branch
      %19 = sbr.rel (%p17) target = $region17
    $region16: #{disentangled_attention.5} parent=1 // pred_region
      %20 = vst [vmem:[#allocation2] sm:$0xff] 0.0
      %21 = vst [vmem:[#allocation2 + $0x8] sm:$0xff] 0.0
    $region17: #{disentangled_attention.5} parent=1 // pred_fallthru
      _
    %v22 = vld [vmem:[#allocation2] sm:$0xff]
    %v23 = vld [vmem:[#allocation2 + $0x8] sm:$0xff]
    %v24 = vld [vmem:[%s0] sm:$0xf]
    %v25 = vld [vmem:[%s0 + $0x4] sm:$0xf]
    %v26 = vld [vmem:[%s1] sm:$0xf]
    %v27 = vld [vmem:[%s1 + $0x4] sm:$0xf]
    %v28 = vld [vmem:[%s1 + $0x8] sm:$0xf]
    %v29 = vld [vmem:[%s1 + $0xc] sm:$0xf]
    %v30 = vld [vmem:[%s1 + $0x10] sm:$0xf]
    %v31 = vld [vmem:[%s1 + $0x14] sm:$0xf]
    %v32 = vld [vmem:[%s1 + $0x18] sm:$0xf]
    %v33 = vld [vmem:[%s1 + $0x1c] sm:$0xf]
    %v34 = vld [vmem:[%s1 + $0x20] sm:$0xf]
    %v35 = vld [vmem:[%s1 + $0x24] sm:$0xf]
    %v36 = vld [vmem:[%s1 + $0x28] sm:$0xf]
    %v37 = vld [vmem:[%s1 + $0x2c] sm:$0xf]
    %v38 = vld [vmem:[%s1 + $0x30] sm:$0xf]
    %v39 = vld [vmem:[%s1 + $0x34] sm:$0xf]
    %v40 = vld [vmem:[%s1 + $0x38] sm:$0xf]
    %v41 = vld [vmem:[%s1 + $0x3c] sm:$0xf]
    %v44 = vunpack.c.l.b16 %v24
    %v45 = vunpack.c.l.b16 %v25
    %v46 = vpack.c.b16 %v45, %v44
    %v64 = vunpack.c.l.b16 %v26
    %v65 = vunpack.c.l.b16 %v27
    %v66 = vunpack.c.l.b16 %v28
    %v67 = vunpack.c.l.b16 %v29
    %v68 = vunpack.c.l.b16 %v30
    %v69 = vunpack.c.l.b16 %v31
    %v70 = vunpack.c.l.b16 %v32
    %v71 = vunpack.c.l.b16 %v33
    %v72 = vunpack.c.l.b16 %v34
    %v73 = vunpack.c.l.b16 %v35
    %v74 = vunpack.c.l.b16 %v36
    %v75 = vunpack.c.l.b16 %v37
    %v76 = vunpack.c.l.b16 %v38
    %v77 = vunpack.c.l.b16 %v39
    %v78 = vunpack.c.l.b16 %v40
    %v79 = vunpack.c.l.b16 %v41
    %v80 = vpack.c.b16 %v65, %v64
    %v81 = vpack.c.b16 %v67, %v66
    %v82 = vpack.c.b16 %v69, %v68
    %v83 = vpack.c.b16 %v71, %v70
    %v84 = vpack.c.b16 %v73, %v72
    %v85 = vpack.c.b16 %v75, %v74
    %v86 = vpack.c.b16 %v77, %v76
    %v87 = vpack.c.b16 %v79, %v78
    %96 = vmatprep.subr.bf16.mxu0 0
    %97 = vmatpush1.bf16.msra.mxu0 %v80
    %98 = vmatprep.subr.bf16.mxu0 0
    %99 = vmatpush1.bf16.msra.mxu0 %v81
    %100 = vmatprep.subr.bf16.mxu0 0
    %101 = vmatpush1.bf16.msra.mxu0 %v82
    %102 = vmatprep.subr.bf16.mxu0 0
    %103 = vmatpush1.bf16.msra.mxu0 %v83
    %104 = vmatprep.subr.bf16.mxu0 0
    %105 = vmatpush1.bf16.msra.mxu0 %v84
    %106 = vmatprep.subr.bf16.mxu0 0
    %107 = vmatpush1.bf16.msra.mxu0 %v85
    %108 = vmatprep.subr.bf16.mxu0 0
    %109 = vmatpush1.bf16.msra.mxu0 %v86
    %110 = vmatprep.subr.bf16.mxu0 0
    %111 = vmatpush1.bf16.msra.mxu0 %v87
    %112 = vmatprep.subr.bf16.mxu0 0
    %113 = vmatpush1.bf16.msra.mxu0 0
    %114 = vmatprep.subr.bf16.mxu0 0
    %115 = vmatpush1.bf16.msra.mxu0 0
    %116 = vmatprep.subr.bf16.mxu0 0
    %117 = vmatpush1.bf16.msra.mxu0 0
    %118 = vmatprep.subr.bf16.mxu0 0
    %119 = vmatpush1.bf16.msra.mxu0 0
    %120 = vmatprep.subr.bf16.mxu0 0
    %121 = vmatpush1.bf16.msra.mxu0 0
    %122 = vmatprep.subr.bf16.mxu0 0
    %123 = vmatpush1.bf16.msra.mxu0 0
    %124 = vmatprep.subr.bf16.mxu0 0
    %125 = vmatpush1.bf16.msra.mxu0 0
    %126 = vmatprep.subr.bf16.mxu0 0
    %127 = vmatpush1.bf16.msra.mxu0 0
    %128 = vmatprep.mubr.bf16.mxu0 0
    %129 = vmatmul.mubr.bf16.gmra.mrb[0].mxu0 %v46
    %v130 = vpop.f32.mrb[0].mxu0
    %v131 = vadd.f32 0.0, %v130
    %v132 = vpop.f32.mrb[0].mxu0
    %v133 = vpop.f32.mrb[0].mxu0
    %v134 = vadd.f32 0.0, %v133
    %v135 = vpop.f32.mrb[0].mxu0
    %136 = vdwg.mxu0
    %v137 = vadd.f32 %v22, %v131
    %v138 = vadd.f32 %v23, %v134
    %139 = vst [vmem:[#allocation2] sm:$0xff] %v137
    %140 = vst [vmem:[#allocation2 + $0x8] sm:$0xff] %v138
    // Predicated region
    $region18: #{disentangled_attention.5} parent=1 // pred_check
      %p141 = pneg %p16
    $region19: #{disentangled_attention.5} parent=1 // pred_check_branch
      %143 = sbr.rel (%p141) target = $region21
    $region20: #{disentangled_attention.5} parent=1 // pred_region
      %v144 = vld [vmem:[#allocation2] sm:$0xff]
      %v145 = vld [vmem:[#allocation2 + $0x8] sm:$0xff]
      %v146 = vld [vmem:[%s2] sm:$0x1]
      %v148 = vlaneseq
      %v149 = vshrl.u32 %v148, 7
      %v150 = vsub.s32 0, %v149
      %v151 = vrot.slane %v146, %v150
      %v153 = vadd.f32 %v144, %v151
      %v154 = vadd.f32 %v145, %v151
      %155 = vst [vmem:[#allocation3] sm:$0xff] %v153
      %156 = vst [vmem:[#allocation3 + $0x8] sm:$0xff] %v154
    $region21: #{disentangled_attention.5} parent=1 // pred_fallthru
      _
    // Predicated region
    $region22: #{disentangled_attention.5} parent=1 // pred_check
      _
    $region23: #{disentangled_attention.5} parent=1 // pred_check_branch
      %158 = sbr.rel (0) target = $region25
    $region24: #{disentangled_attention.5} parent=1 // pred_region
      %s160 = ssub.s32 256, 256
      %161 = vsyncadd [#allocation4], %s160
      %s162 = sshll.u32 [#allocation3], 4
      %s163 = int_to_ptr.vmem [resolvable:$true] %s162
      %168 = dma.vmem_to_hbm [thread:$0]  %s163, 256, %s3, [#allocation4], 128, 128, 8
    $region25: #{disentangled_attention.5} parent=1 // pred_fallthru
      _
    // Predicated region
    $region26: #{disentangled_attention.5} parent=1 // pred_check
      _
    $region27: #{disentangled_attention.5} parent=1 // pred_check_branch
      %170 = sbr.rel (0) target = $region29
    $region28: #{disentangled_attention.5} parent=1 // pred_region
      %171 = dma.done [#allocation4], 256
    $region29: #{disentangled_attention.5} parent=1 // pred_fallthru
      _
    %172 = vsyncpa [#allocation4], 1

// kernel: disentangled_attention.4
$region0: #{disentangled_attention.4}
  #allocation0 [shape = 'u32[]', space=smem, size = 0x4, offset = 0x4, fixed_abs, tag = 'smem constant byte address 0x4 - core index']
  #allocation1 [shape = 'u32[144,128]{1,0:T(1,128)}', space=vmem, size = 0x12000, scoped, tag = 'internal scratch']
  #allocation2 [shape = 'f32[4,8,1]{2,1,0:T(8,128)}', space=vmem, size = 0x4000, scoped, tag = 'scratch operand']
  #allocation3 [shape = 'f32[4,8,1]{2,1,0:T(8,128)}', space=vmem, size = 0x4000, scoped, tag = 'scratch operand']
  #allocation4 [shape = 'f32[4,8,32]{2,1,0:T(8,128)}', space=vmem, size = 0x4000, scoped, tag = 'scratch operand']
  %s0 = inlined_call_operand.vmem [shape: bf16[2,8,384], index: 0, kind: input, shape index: {}, may-alias: {0,1,2}]
  %s1 = inlined_call_operand.vmem [shape: bf16[2,8,384], index: 1, kind: input, shape index: {}, may-alias: {0,1,2}]
  %s2 = inlined_call_operand.vmem [shape: bf16[2,8,384], index: 2, kind: input, shape index: {}, may-alias: {0,1,2}]
  %s3 = inlined_call_operand.vmem [shape: bf16[8,32], index: 3, kind: input, shape index: {}, may-alias: {3,4}]
  %s4 = inlined_call_operand.vmem [shape: bf16[8,32], index: 4, kind: input, shape index: {}, may-alias: {3,4}]
  %s5 = inlined_call_operand.vmem [shape: f32[4,1,1], index: 5, kind: input, shape index: {}]
  %s6 = inlined_call_operand.vmem [shape: bf16[2,8,128], index: 6, kind: output, shape index: {}]
  %s7 = sld [smem:[#allocation0]]
  $region65: #{disentangled_attention.4} parent=0
    _
  %s9 = ssub.s32 1, %s7
  %s10 = scalar_select 0, %s9, %s7
  loop: start=0, step=1, limit=4
  $region2: #{disentangled_attention.4} parent=0 // loop_pre_header
    _
  $region3: #{disentangled_attention.4} parent=0 // loop_header
    %s12 = sphi 0, %s16
    %p13 = scmp.ge.s32.totalorder %s12, 4
    %s19 = sphi 0, %s38
    %s20 = sphi 0, %s34
    %s21 = sphi 0, %s30
    %s22 = sphi 0, %s19
    %s23 = sphi 0, %s20
    %s24 = sphi 0, %s21
    %s25 = sphi 0, %s22
    %s26 = sphi 0, %s23
    %s27 = sphi 0, %s24
    %s43 = sphi 0, %s45
    %s46 = sphi 0, %s43
    %s47 = sphi 0, %s46
    %s63 = sphi 0, %s47
    %s71 = sphi 0, %s73
    %s74 = sphi 0, %s71
    %s75 = sphi 0, %s74
    %s91 = sphi 0, %s75
    %s99 = sphi 0, %s101
    %s102 = sphi 0, %s99
    %s103 = sphi 0, %s102
    %s119 = sphi 0, %s103
    %s125 = sphi 0, %s127
    %s128 = sphi 0, %s125
    %s129 = sphi 0, %s128
    %s145 = sphi 0, %s129
    %s151 = sphi 0, %s153
    %s154 = sphi 0, %s151
    %s155 = sphi 0, %s154
    %s171 = sphi 0, %s155
    %s175 = sphi 0, %s175
    %s177 = sphi 0, %s175
    %s178 = sphi 0, %s177
    %s192 = sphi 0, %s178
    %s200 = sphi 0, %s202
    %s203 = sphi 0, %s200
    %s204 = sphi 0, %s203
    %s220 = sphi 0, %s204
  $region4: #{disentangled_attention.4} parent=0 // loop_header_branch
    %15 = sbr.rel (%p13) target = $region8
  $region5: #{disentangled_attention.4} parent=0 // loop_body
    %s17 = ssub.s32 %s12, 1
    %s18 = ssub.s32 %s12, 2
    %s28 = sadd.s32 1, %s21
    %p29 = scmp.ge.s32.totalorder %s28, 1
    %s30 = scalar_select %p29, 0, %s28
    %s31 = sadd.s32 1, %s20
    %s32 = scalar_select %p29, %s31, %s20
    %p33 = scmp.ge.s32.totalorder %s32, 1
    %s34 = scalar_select %p33, 0, %s32
    %s35 = sadd.s32 1, %s19
    %s36 = scalar_select %p33, %s35, %s19
    %p37 = scmp.ge.s32.totalorder %s36, 2
    %s38 = scalar_select %p37, 0, %s36
    %s39 = ssub.s32 %s19, %s38
    %s40 = ssub.s32 %s20, %s34
    %s41 = sor.u32 %s39, %s40
    %p42 = scmp.eq.s32.totalorder %s41, 0
    %s44 = sadd.s32 %s43, 1
    %s45 = scalar_select %p42, %s43, %s44
    %p48 = pneg %p42
    %p49 = scmp.eq.s32.totalorder %s12, 1
    %p50 = por %p48, %p49
    %p51 = scmp.ne.s32.totalorder %s43, %s46
    %p52 = scmp.eq.s32.totalorder %s12, 0
    %p53 = por %p51, %p52
    %p54 = scmp.ne.s32.totalorder %s43, %s46
    %p55 = scmp.eq.s32.totalorder %s17, 1
    %p56 = por %p54, %p55
    %p57 = scmp.ne.s32.totalorder %s46, %s47
    %p58 = scmp.eq.s32.totalorder %s17, 0
    %p59 = por %p57, %p58
    %p60 = scmp.ne.s32.totalorder %s46, %s47
    %p61 = scmp.eq.s32.totalorder %s18, 1
    %p62 = por %p60, %p61
    %p64 = scmp.ne.s32.totalorder %s47, %s63
    %p65 = scmp.eq.s32.totalorder %s18, 0
    %p66 = por %p64, %p65
    %s67 = ssub.s32 %s19, %s38
    %s68 = ssub.s32 %s21, %s30
    %s69 = sor.u32 %s67, %s68
    %p70 = scmp.eq.s32.totalorder %s69, 0
    %s72 = sadd.s32 %s71, 1
    %s73 = scalar_select %p70, %s71, %s72
    %p76 = pneg %p70
    %p77 = scmp.eq.s32.totalorder %s12, 1
    %p78 = por %p76, %p77
    %p79 = scmp.ne.s32.totalorder %s71, %s74
    %p80 = scmp.eq.s32.totalorder %s12, 0
    %p81 = por %p79, %p80
    %p82 = scmp.ne.s32.totalorder %s71, %s74
    %p83 = scmp.eq.s32.totalorder %s17, 1
    %p84 = por %p82, %p83
    %p85 = scmp.ne.s32.totalorder %s74, %s75
    %p86 = scmp.eq.s32.totalorder %s17, 0
    %p87 = por %p85, %p86
    %p88 = scmp.ne.s32.totalorder %s74, %s75
    %p89 = scmp.eq.s32.totalorder %s18, 1
    %p90 = por %p88, %p89
    %p92 = scmp.ne.s32.totalorder %s75, %s91
    %p93 = scmp.eq.s32.totalorder %s18, 0
    %p94 = por %p92, %p93
    %s95 = ssub.s32 %s19, %s38
    %s96 = ssub.s32 %s21, %s30
    %s97 = sor.u32 %s95, %s96
    %p98 = scmp.eq.s32.totalorder %s97, 0
    %s100 = sadd.s32 %s99, 1
    %s101 = scalar_select %p98, %s99, %s100
    %p104 = pneg %p98
    %p105 = scmp.eq.s32.totalorder %s12, 1
    %p106 = por %p104, %p105
    %p107 = scmp.ne.s32.totalorder %s99, %s102
    %p108 = scmp.eq.s32.totalorder %s12, 0
    %p109 = por %p107, %p108
    %p110 = scmp.ne.s32.totalorder %s99, %s102
    %p111 = scmp.eq.s32.totalorder %s17, 1
    %p112 = por %p110, %p111
    %p113 = scmp.ne.s32.totalorder %s102, %s103
    %p114 = scmp.eq.s32.totalorder %s17, 0
    %p115 = por %p113, %p114
    %p116 = scmp.ne.s32.totalorder %s102, %s103
    %p117 = scmp.eq.s32.totalorder %s18, 1
    %p118 = por %p116, %p117
    %p120 = scmp.ne.s32.totalorder %s103, %s119
    %p121 = scmp.eq.s32.totalorder %s18, 0
    %p122 = por %p120, %p121
    %s123 = ssub.s32 %s20, %s34
    %p124 = scmp.eq.s32.totalorder %s123, 0
    %s126 = sadd.s32 %s125, 1
    %s127 = scalar_select %p124, %s125, %s126
    %p130 = pneg %p124
    %p131 = scmp.eq.s32.totalorder %s12, 1
    %p132 = por %p130, %p131
    %p133 = scmp.ne.s32.totalorder %s125, %s128
    %p134 = scmp.eq.s32.totalorder %s12, 0
    %p135 = por %p133, %p134
    %p136 = scmp.ne.s32.totalorder %s125, %s128
    %p137 = scmp.eq.s32.totalorder %s17, 1
    %p138 = por %p136, %p137
    %p139 = scmp.ne.s32.totalorder %s128, %s129
    %p140 = scmp.eq.s32.totalorder %s17, 0
    %p141 = por %p139, %p140
    %p142 = scmp.ne.s32.totalorder %s128, %s129
    %p143 = scmp.eq.s32.totalorder %s18, 1
    %p144 = por %p142, %p143
    %p146 = scmp.ne.s32.totalorder %s129, %s145
    %p147 = scmp.eq.s32.totalorder %s18, 0
    %p148 = por %p146, %p147
    %s149 = ssub.s32 %s21, %s30
    %p150 = scmp.eq.s32.totalorder %s149, 0
    %s152 = sadd.s32 %s151, 1
    %s153 = scalar_select %p150, %s151, %s152
    %p156 = pneg %p150
    %p157 = scmp.eq.s32.totalorder %s12, 1
    %p158 = por %p156, %p157
    %p159 = scmp.ne.s32.totalorder %s151, %s154
    %p160 = scmp.eq.s32.totalorder %s12, 0
    %p161 = por %p159, %p160
    %p162 = scmp.ne.s32.totalorder %s151, %s154
    %p163 = scmp.eq.s32.totalorder %s17, 1
    %p164 = por %p162, %p163
    %p165 = scmp.ne.s32.totalorder %s154, %s155
    %p166 = scmp.eq.s32.totalorder %s17, 0
    %p167 = por %p165, %p166
    %p168 = scmp.ne.s32.totalorder %s154, %s155
    %p169 = scmp.eq.s32.totalorder %s18, 1
    %p170 = por %p168, %p169
    %p172 = scmp.ne.s32.totalorder %s155, %s171
    %p173 = scmp.eq.s32.totalorder %s18, 0
    %p174 = por %p172, %p173
    %s176 = sadd.s32 %s175, 1
    %p179 = scmp.eq.s32.totalorder %s12, 1
    %p180 = scmp.ne.s32.totalorder %s175, %s177
    %p181 = scmp.eq.s32.totalorder %s12, 0
    %p182 = por %p180, %p181
    %p183 = scmp.ne.s32.totalorder %s175, %s177
    %p184 = scmp.eq.s32.totalorder %s17, 1
    %p185 = por %p183, %p184
    %p186 = scmp.ne.s32.totalorder %s177, %s178
    %p187 = scmp.eq.s32.totalorder %s17, 0
    %p188 = por %p186, %p187
    %p189 = scmp.ne.s32.totalorder %s177, %s178
    %p190 = scmp.eq.s32.totalorder %s18, 1
    %p191 = por %p189, %p190
    %p193 = scmp.ne.s32.totalorder %s178, %s192
    %p194 = scmp.eq.s32.totalorder %s18, 0
    %p195 = por %p193, %p194
    %s196 = ssub.s32 %s19, %s38
    %s197 = ssub.s32 %s20, %s34
    %s198 = sor.u32 %s196, %s197
    %p199 = scmp.eq.s32.totalorder %s198, 0
    %s201 = sadd.s32 %s200, 1
    %s202 = scalar_select %p199, %s200, %s201
    %p205 = pneg %p199
    %p206 = scmp.eq.s32.totalorder %s12, 1
    %p207 = por %p205, %p206
    %p208 = scmp.ne.s32.totalorder %s200, %s203
    %p209 = scmp.eq.s32.totalorder %s12, 0
    %p210 = por %p208, %p209
    %p211 = scmp.ne.s32.totalorder %s200, %s203
    %p212 = scmp.eq.s32.totalorder %s17, 1
    %p213 = por %p211, %p212
    %p214 = scmp.ne.s32.totalorder %s203, %s204
    %p215 = scmp.eq.s32.totalorder %s17, 0
    %p216 = por %p214, %p215
    %p217 = scmp.ne.s32.totalorder %s203, %s204
    %p218 = scmp.eq.s32.totalorder %s18, 1
    %p219 = por %p217, %p218
    %p221 = scmp.ne.s32.totalorder %s204, %s220
    %p222 = scmp.eq.s32.totalorder %s18, 0
    %p223 = por %p221, %p222
    %p224 = scmp.le.s32.totalorder 1, %s12
    %p225 = scmp.lt.s32.totalorder %s12, 3
    %p226 = pnand %p224, %p225
    %p227 = pneg %p226
    // Predicated region
    $region9: #{disentangled_attention.4} parent=5 // pred_check
      _
    $region10: #{disentangled_attention.4} parent=5 // pred_check_branch
      %229 = sbr.rel (%p226) target = $region12
    $region11: #{disentangled_attention.4} parent=5 // pred_region
      %s230 = ssub.s32 %s12, 1
      // Predicated region
      $region13: #{disentangled_attention.4} parent=11 // pred_check
        %p231 = pneg %p141
      $region14: #{disentangled_attention.4} parent=11 // pred_check_branch
        %233 = sbr.rel (%p231) target = $region16
      $region15: #{disentangled_attention.4} parent=11 // pred_region
        %p234 = scmp.lt.s32.totalorder %s23, 0
        %s235 = scalar_select %p234, %s23, 0
        %s236 = smul.addr %s235, 4
        %s237 = scalar_lea.vmem %s3, %s236
      $region16: #{disentangled_attention.4} parent=11 // pred_fallthru
        _
      // Predicated region
      $region17: #{disentangled_attention.4} parent=11 // pred_check
        %p238 = pneg %p167
      $region18: #{disentangled_attention.4} parent=11 // pred_check_branch
        %240 = sbr.rel (%p238) target = $region20
      $region19: #{disentangled_attention.4} parent=11 // pred_region
        %p241 = scmp.lt.s32.totalorder %s24, 0
        %s242 = scalar_select %p241, %s24, 0
        %s243 = smul.addr %s242, 4
        %s244 = scalar_lea.vmem %s4, %s243
      $region20: #{disentangled_attention.4} parent=11 // pred_fallthru
        _
      // Predicated region
      $region21: #{disentangled_attention.4} parent=11 // pred_check
        %p245 = pneg %p188
      $region22: #{disentangled_attention.4} parent=11 // pred_check_branch
        %247 = sbr.rel (%p245) target = $region24
      $region23: #{disentangled_attention.4} parent=11 // pred_region
        _
      $region24: #{disentangled_attention.4} parent=11 // pred_fallthru
        _
    $region12: #{disentangled_attention.4} parent=5 // pred_fallthru
      _
    %p248 = scmp.lt.s32.totalorder %s12, 2
    // Predicated region
    $region25: #{disentangled_attention.4} parent=5 // pred_check
      %p249 = pneg %p248
    $region26: #{disentangled_attention.4} parent=5 // pred_check_branch
      %251 = sbr.rel (%p249) target = $region28
    $region27: #{disentangled_attention.4} parent=5 // pred_region
      // Predicated region
      $region29: #{disentangled_attention.4} parent=27 // pred_check
        %p252 = pneg %p53
      $region30: #{disentangled_attention.4} parent=27 // pred_check_branch
        %254 = sbr.rel (%p252) target = $region32
      $region31: #{disentangled_attention.4} parent=27 // pred_region
        %p255 = scmp.lt.s32.totalorder %s19, 1
        %s256 = scalar_select %p255, %s19, 1
        %p257 = scmp.lt.s32.totalorder %s20, 0
        %s258 = scalar_select %p257, %s20, 0
        %s259 = smul.addr %s258, 3
        %s260 = smul.addr %s256, 3
        %s261 = sadd.s32 %s259, %s260
        %s262 = smul.addr %s261, 4
        %s263 = scalar_lea.vmem %s0, %s262
      $region32: #{disentangled_attention.4} parent=27 // pred_fallthru
        _
      // Predicated region
      $region33: #{disentangled_attention.4} parent=27 // pred_check
        %p264 = pneg %p81
      $region34: #{disentangled_attention.4} parent=27 // pred_check_branch
        %266 = sbr.rel (%p264) target = $region36
      $region35: #{disentangled_attention.4} parent=27 // pred_region
        %p267 = scmp.lt.s32.totalorder %s19, 1
        %s268 = scalar_select %p267, %s19, 1
        %p269 = scmp.lt.s32.totalorder %s21, 0
        %s270 = scalar_select %p269, %s21, 0
        %s271 = smul.addr %s270, 3
        %s272 = sadd.s32 1, %s271
        %s273 = smul.addr %s268, 3
        %s274 = sadd.s32 %s272, %s273
        %s275 = smul.addr %s274, 4
        %s276 = scalar_lea.vmem %s1, %s275
      $region36: #{disentangled_attention.4} parent=27 // pred_fallthru
        _
      // Predicated region
      $region37: #{disentangled_attention.4} parent=27 // pred_check
        %p277 = pneg %p109
      $region38: #{disentangled_attention.4} parent=27 // pred_check_branch
        %279 = sbr.rel (%p277) target = $region40
      $region39: #{disentangled_attention.4} parent=27 // pred_region
        %p280 = scmp.lt.s32.totalorder %s19, 1
        %s281 = scalar_select %p280, %s19, 1
        %p282 = scmp.lt.s32.totalorder %s21, 0
        %s283 = scalar_select %p282, %s21, 0
        %s284 = smul.addr %s283, 3
        %s285 = sadd.s32 2, %s284
        %s286 = smul.addr %s281, 3
        %s287 = sadd.s32 %s285, %s286
        %s288 = smul.addr %s287, 4
        %s289 = scalar_lea.vmem %s2, %s288
      $region40: #{disentangled_attention.4} parent=27 // pred_fallthru
        _
    $region28: #{disentangled_attention.4} parent=5 // pred_fallthru
      _
    %p290 = scmp.le.s32.totalorder 1, %s12
    %p291 = scmp.lt.s32.totalorder %s12, 3
    %p292 = pnand %p290, %p291
    %p293 = pneg %p292
    // Predicated region
    $region41: #{disentangled_attention.4} parent=5 // pred_check
      _
    $region42: #{disentangled_attention.4} parent=5 // pred_check_branch
      %295 = sbr.rel (%p292) target = $region44
    $region43: #{disentangled_attention.4} parent=5 // pred_region
      %s296 = ssub.s32 %s12, 1
      %p297 = scmp.lt.s32.totalorder %s22, 1
      %s298 = scalar_select %p297, %s22, 1
      %p299 = scmp.lt.s32.totalorder %s23, 0
      %s300 = scalar_select %p299, %s23, 0
      %s301 = smul.addr %s300, 3
      %s302 = smul.addr %s298, 3
      %s303 = sadd.s32 %s301, %s302
      %s304 = smul.addr %s303, 4
      %s305 = scalar_lea.vmem %s0, %s304
      %p306 = pneg %p59
      %p307 = pneg %p56
      %p308 = scmp.lt.s32.totalorder %s22, 1
      %s309 = scalar_select %p308, %s22, 1
      %p310 = scmp.lt.s32.totalorder %s24, 0
      %s311 = scalar_select %p310, %s24, 0
      %s312 = smul.addr %s311, 3
      %s313 = sadd.s32 1, %s312
      %s314 = smul.addr %s309, 3
      %s315 = sadd.s32 %s313, %s314
      %s316 = smul.addr %s315, 4
      %s317 = scalar_lea.vmem %s1, %s316
      %p318 = pneg %p87
      %p319 = pneg %p84
      %p320 = scmp.lt.s32.totalorder %s22, 1
      %s321 = scalar_select %p320, %s22, 1
      %p322 = scmp.lt.s32.totalorder %s24, 0
      %s323 = scalar_select %p322, %s24, 0
      %s324 = smul.addr %s323, 3
      %s325 = sadd.s32 2, %s324
      %s326 = smul.addr %s321, 3
      %s327 = sadd.s32 %s325, %s326
      %s328 = smul.addr %s327, 4
      %s329 = scalar_lea.vmem %s2, %s328
      %p330 = pneg %p115
      %p331 = pneg %p112
      %p332 = scmp.lt.s32.totalorder %s23, 0
      %s333 = scalar_select %p332, %s23, 0
      %s334 = smul.addr %s333, 4
      %s335 = scalar_lea.vmem %s3, %s334
      %p336 = pneg %p141
      %p337 = pneg %p138
      %p338 = scmp.lt.s32.totalorder %s24, 0
      %s339 = scalar_select %p338, %s24, 0
      %s340 = smul.addr %s339, 4
      %s341 = scalar_lea.vmem %s4, %s340
      %p342 = pneg %p167
      %p343 = pneg %p164
      %p344 = pneg %p188
      %p345 = pneg %p185
      %p346 = pneg %p216
      %p347 = pneg %p213
      %p348 = scmp.lt.s32.totalorder %s22, 1
      %s349 = scalar_select %p348, %s22, 1
      %p350 = scmp.lt.s32.totalorder %s23, 0
      %s351 = scalar_select %p350, %s23, 0
      %s352 = sadd.s32 %s351, %s349
      %s353 = smul.addr %s352, 4
      %s354 = scalar_lea.vmem %s6, %s353
      %p355 = scmp.lt.s32.totalorder %s22, 1
      %s356 = scalar_select %p355, %s22, 1
      %p357 = scmp.lt.s32.totalorder %s23, 0
      %s358 = scalar_select %p357, %s23, 0
      %s359 = smul.addr %s358, 3
      %s360 = smul.addr %s356, 3
      %s361 = sadd.s32 %s359, %s360
      %s362 = smul.addr %s361, 4
      %s363 = scalar_lea.vmem %s0, %s362
      %p364 = scmp.lt.s32.totalorder %s22, 1
      %s365 = scalar_select %p364, %s22, 1
      %p366 = scmp.lt.s32.totalorder %s24, 0
      %s367 = scalar_select %p366, %s24, 0
      %s368 = smul.addr %s367, 3
      %s369 = sadd.s32 1, %s368
      %s370 = smul.addr %s365, 3
      %s371 = sadd.s32 %s369, %s370
      %s372 = smul.addr %s371, 4
      %s373 = scalar_lea.vmem %s1, %s372
      %p374 = scmp.lt.s32.totalorder %s22, 1
      %s375 = scalar_select %p374, %s22, 1
      %p376 = scmp.lt.s32.totalorder %s24, 0
      %s377 = scalar_select %p376, %s24, 0
      %s378 = smul.addr %s377, 3
      %s379 = sadd.s32 2, %s378
      %s380 = smul.addr %s375, 3
      %s381 = sadd.s32 %s379, %s380
      %s382 = smul.addr %s381, 4
      %s383 = scalar_lea.vmem %s2, %s382
      %p384 = scmp.lt.s32.totalorder %s23, 0
      %s385 = scalar_select %p384, %s23, 0
      %s386 = smul.addr %s385, 4
      %s387 = scalar_lea.vmem %s3, %s386
      %p388 = scmp.lt.s32.totalorder %s24, 0
      %s389 = scalar_select %p388, %s24, 0
      %s390 = smul.addr %s389, 4
      %s391 = scalar_lea.vmem %s4, %s390
      %p392 = scmp.lt.s32.totalorder %s22, 1
      %s393 = scalar_select %p392, %s22, 1
      %p394 = scmp.lt.s32.totalorder %s23, 0
      %s395 = scalar_select %p394, %s23, 0
      %s396 = sadd.s32 %s395, %s393
      %s397 = smul.addr %s396, 4
      %s398 = scalar_lea.vmem %s6, %s397
      %p400 = scmp.eq.s32.totalorder %s24, 0
      // Predicated region
      $region45: #{disentangled_attention.4} parent=43 // pred_check
        %p401 = pneg %p400
      $region46: #{disentangled_attention.4} parent=43 // pred_check_branch
        %403 = sbr.rel (%p401) target = $region48
      $region47: #{disentangled_attention.4} parent=43 // pred_region
        %vm404 = vcmask 7168
        %405 = vst.msk [vmem:[#allocation2] sm:$0xff] %vm404, -inf
        %406 = vst.msk [vmem:[#allocation2 + $0x8] sm:$0xff] %vm404, -inf
        %407 = vst.msk [vmem:[#allocation2 + $0x10] sm:$0xff] %vm404, -inf
        %408 = vst.msk [vmem:[#allocation2 + $0x18] sm:$0xff] %vm404, -inf
        %409 = vst.msk [vmem:[#allocation3] sm:$0xff] %vm404, 0.0
        %410 = vst.msk [vmem:[#allocation3 + $0x8] sm:$0xff] %vm404, 0.0
        %411 = vst.msk [vmem:[#allocation3 + $0x10] sm:$0xff] %vm404, 0.0
        %412 = vst.msk [vmem:[#allocation3 + $0x18] sm:$0xff] %vm404, 0.0
        %vm413 = vcmask 261120
        %414 = vst.msk [vmem:[#allocation4] sm:$0xff] %vm413, 0.0
        %415 = vst.msk [vmem:[#allocation4 + $0x8] sm:$0xff] %vm413, 0.0
        %416 = vst.msk [vmem:[#allocation4 + $0x10] sm:$0xff] %vm413, 0.0
        %417 = vst.msk [vmem:[#allocation4 + $0x18] sm:$0xff] %vm413, 0.0
      $region48: #{disentangled_attention.4} parent=43 // pred_fallthru
        _
      %v418 = vld [vmem:[%s363] sm:$0xf]
      %420 = vrot.lane.b32.xlu0 %v418, 96
      %v421 = vpop.permute.xlu0 %420
      %422 = vrot.lane.b32.xlu0 %v418, 64
      %v423 = vpop.permute.xlu0 %422
      %424 = vrot.lane.b32.xlu0 %v418, 32
      %v425 = vpop.permute.xlu0 %424
      %v426 = vld [vmem:[%s373] sm:$0xf]
      %428 = vrot.lane.b32.xlu0 %v426, 96
      %v429 = vpop.permute.xlu0 %428
      %430 = vrot.lane.b32.xlu0 %v426, 64
      %v431 = vpop.permute.xlu0 %430
      %432 = vrot.lane.b32.xlu0 %v426, 32
      %v433 = vpop.permute.xlu0 %432
      %v434 = vld [vmem:[%s383] sm:$0xf]
      %436 = vrot.lane.b32.xlu0 %v434, 96
      %v437 = vpop.permute.xlu0 %436
      %438 = vrot.lane.b32.xlu0 %v434, 64
      %v439 = vpop.permute.xlu0 %438
      %440 = vrot.lane.b32.xlu0 %v434, 32
      %v441 = vpop.permute.xlu0 %440
      %v442 = vld [vmem:[%s387] sm:$0xf]
      %v443 = vld [vmem:[%s391] sm:$0xf]
      %vm444 = vcmask 261120
      %v446 = vsel %vm444, %v442, 0
      %v449 = vsel %vm444, %v443, 0
      %451 = vmatprep.subr.bf16.mxu0 0
      %452 = vmatpush1.bf16.xpose.msra.mxu0 %v449
      %453 = vmatprep.subr.bf16.mxu0 0
      %454 = vmatpush1.bf16.xpose.msra.mxu0 0
      %455 = vmatprep.subr.bf16.mxu0 0
      %456 = vmatpush1.bf16.xpose.msra.mxu0 0
      %457 = vmatprep.subr.bf16.mxu0 0
      %458 = vmatpush1.bf16.xpose.msra.mxu0 0
      %459 = vmatprep.subr.bf16.mxu0 0
      %460 = vmatpush1.bf16.xpose.msra.mxu0 0
      %461 = vmatprep.subr.bf16.mxu0 0
      %462 = vmatpush1.bf16.xpose.msra.mxu0 0
      %463 = vmatprep.subr.bf16.mxu0 0
      %464 = vmatpush1.bf16.xpose.msra.mxu0 0
      %465 = vmatprep.subr.bf16.mxu0 0
      %466 = vmatpush1.bf16.xpose.msra.mxu0 0
      %467 = vmatprep.subr.bf16.mxu0 0
      %468 = vmatpush1.bf16.xpose.msra.mxu0 0
      %469 = vmatprep.subr.bf16.mxu0 0
      %470 = vmatpush1.bf16.xpose.msra.mxu0 0
      %471 = vmatprep.subr.bf16.mxu0 0
      %472 = vmatpush1.bf16.xpose.msra.mxu0 0
      %473 = vmatprep.subr.bf16.mxu0 0
      %474 = vmatpush1.bf16.xpose.msra.mxu0 0
      %475 = vmatprep.subr.bf16.mxu0 0
      %476 = vmatpush1.bf16.xpose.msra.mxu0 0
      %477 = vmatprep.subr.bf16.mxu0 0
      %478 = vmatpush1.bf16.xpose.msra.mxu0 0
      %479 = vmatprep.subr.bf16.mxu0 0
      %480 = vmatpush1.bf16.xpose.msra.mxu0 0
      %481 = vmatprep.subr.bf16.mxu0 0
      %482 = vmatpush1.bf16.xpose.msra.mxu0 0
      %483 = vmatprep.mubr.bf16.mxu0 0
      %484 = vmatmul.mubr.bf16.gmra.mrb[0].mxu0 %v446
      %v485 = vpop.f32.mrb[0].mxu0
      %v486 = vadd.f32 0.0, %v485
      %v487 = vpop.f32.mrb[0].mxu0
      %v488 = vpop.f32.mrb[0].mxu0
      %v489 = vpop.f32.mrb[0].mxu0
      %490 = vdwg.mxu0
      %v491 = vld [vmem:[%s5] sm:$0x1]
      %v492 = vld [vmem:[%s5 + $0x1] sm:$0x1]
      %v493 = vld [vmem:[%s5 + $0x2] sm:$0x1]
      %v494 = vld [vmem:[%s5 + $0x3] sm:$0x1]
      %v499 = vlaneseq
      %v500 = vshrl.u32 %v499, 7
      %v501 = vsub.s32 0, %v500
      %v502 = vrot.slane %v491, %v501
      %v503 = vlaneseq
      %v504 = vshrl.u32 %v503, 7
      %v505 = vsub.s32 0, %v504
      %v506 = vrot.slane %v492, %v505
      %v507 = vlaneseq
      %v508 = vshrl.u32 %v507, 7
      %v509 = vsub.s32 0, %v508
      %v510 = vrot.slane %v493, %v509
      %v511 = vlaneseq
      %v512 = vshrl.u32 %v511, 7
      %v513 = vsub.s32 0, %v512
      %v514 = vrot.slane %v494, %v513
      %515 = vset.pattern.permute.xlu0 0
      %516 = vperm.xlu0 %515, %v502
      %v517 = vpop.permute.xlu0 %516
      %519 = vset.pattern.permute.xlu0 0
      %520 = vperm.xlu0 %519, %v506
      %v521 = vpop.permute.xlu0 %520
      %523 = vset.pattern.permute.xlu0 0
      %524 = vperm.xlu0 %523, %v510
      %v525 = vpop.permute.xlu0 %524
      %527 = vset.pattern.permute.xlu0 0
      %528 = vperm.xlu0 %527, %v514
      %v529 = vpop.permute.xlu0 %528
      %v531 = vmul.f32 %v517, %v486
      %v532 = vmul.f32 %v521, %v486
      %v533 = vmul.f32 %v525, %v486
      %v534 = vmul.f32 %v529, %v486
      %v536 = vsel %vm444, %v418, 0
      %v539 = vsel %vm444, %v426, 0
      %541 = vmatprep.subr.bf16.mxu0 0
      %542 = vmatpush1.bf16.xpose.msra.mxu0 %v539
      %543 = vmatprep.subr.bf16.mxu0 0
      %544 = vmatpush1.bf16.xpose.msra.mxu0 0
      %545 = vmatprep.subr.bf16.mxu0 0
      %546 = vmatpush1.bf16.xpose.msra.mxu0 0
      %547 = vmatprep.subr.bf16.mxu0 0
      %548 = vmatpush1.bf16.xpose.msra.mxu0 0
      %549 = vmatprep.subr.bf16.mxu0 0
      %550 = vmatpush1.bf16.xpose.msra.mxu0 0
      %551 = vmatprep.subr.bf16.mxu0 0
      %552 = vmatpush1.bf16.xpose.msra.mxu0 0
      %553 = vmatprep.subr.bf16.mxu0 0
      %554 = vmatpush1.bf16.xpose.msra.mxu0 0
      %555 = vmatprep.subr.bf16.mxu0 0
      %556 = vmatpush1.bf16.xpose.msra.mxu0 0
      %557 = vmatprep.subr.bf16.mxu0 0
      %558 = vmatpush1.bf16.xpose.msra.mxu0 0
      %559 = vmatprep.subr.bf16.mxu0 0
      %560 = vmatpush1.bf16.xpose.msra.mxu0 0
      %561 = vmatprep.subr.bf16.mxu0 0
      %562 = vmatpush1.bf16.xpose.msra.mxu0 0
      %563 = vmatprep.subr.bf16.mxu0 0
      %564 = vmatpush1.bf16.xpose.msra.mxu0 0
      %565 = vmatprep.subr.bf16.mxu0 0
      %566 = vmatpush1.bf16.xpose.msra.mxu0 0
      %567 = vmatprep.subr.bf16.mxu0 0
      %568 = vmatpush1.bf16.xpose.msra.mxu0 0
      %569 = vmatprep.subr.bf16.mxu0 0
      %570 = vmatpush1.bf16.xpose.msra.mxu0 0
      %571 = vmatprep.subr.bf16.mxu0 0
      %572 = vmatpush1.bf16.xpose.msra.mxu0 0
      %573 = vmatprep.mubr.bf16.mxu0 0
      %574 = vmatmul.mubr.bf16.gmra.mrb[0].mxu0 %v536
      %v575 = vpop.f32.mrb[0].mxu0
      %v576 = vadd.f32 %v531, %v575
      %v577 = vpop.f32.mrb[0].mxu0
      %v578 = vpop.f32.mrb[0].mxu0
      %v579 = vpop.f32.mrb[0].mxu0
      %580 = vdwg.mxu0
      %v582 = vsel %vm444, %v421, 0
      %v585 = vsel %vm444, %v429, 0
      %587 = vmatprep.subr.bf16.mxu0 0
      %588 = vmatpush1.bf16.xpose.msra.mxu0 %v585
      %589 = vmatprep.subr.bf16.mxu0 0
      %590 = vmatpush1.bf16.xpose.msra.mxu0 0
      %591 = vmatprep.subr.bf16.mxu0 0
      %592 = vmatpush1.bf16.xpose.msra.mxu0 0
      %593 = vmatprep.subr.bf16.mxu0 0
      %594 = vmatpush1.bf16.xpose.msra.mxu0 0
      %595 = vmatprep.subr.bf16.mxu0 0
      %596 = vmatpush1.bf16.xpose.msra.mxu0 0
      %597 = vmatprep.subr.bf16.mxu0 0
      %598 = vmatpush1.bf16.xpose.msra.mxu0 0
      %599 = vmatprep.subr.bf16.mxu0 0
      %600 = vmatpush1.bf16.xpose.msra.mxu0 0
      %601 = vmatprep.subr.bf16.mxu0 0
      %602 = vmatpush1.bf16.xpose.msra.mxu0 0
      %603 = vmatprep.subr.bf16.mxu0 0
      %604 = vmatpush1.bf16.xpose.msra.mxu0 0
      %605 = vmatprep.subr.bf16.mxu0 0
      %606 = vmatpush1.bf16.xpose.msra.mxu0 0
      %607 = vmatprep.subr.bf16.mxu0 0
      %608 = vmatpush1.bf16.xpose.msra.mxu0 0
      %609 = vmatprep.subr.bf16.mxu0 0
      %610 = vmatpush1.bf16.xpose.msra.mxu0 0
      %611 = vmatprep.subr.bf16.mxu0 0
      %612 = vmatpush1.bf16.xpose.msra.mxu0 0
      %613 = vmatprep.subr.bf16.mxu0 0
      %614 = vmatpush1.bf16.xpose.msra.mxu0 0
      %615 = vmatprep.subr.bf16.mxu0 0
      %616 = vmatpush1.bf16.xpose.msra.mxu0 0
      %617 = vmatprep.subr.bf16.mxu0 0
      %618 = vmatpush1.bf16.xpose.msra.mxu0 0
      %619 = vmatprep.mubr.bf16.mxu0 0
      %620 = vmatmul.mubr.bf16.gmra.mrb[0].mxu0 %v582
      %v621 = vpop.f32.mrb[0].mxu0
      %v622 = vadd.f32 %v532, %v621
      %v623 = vpop.f32.mrb[0].mxu0
      %v624 = vpop.f32.mrb[0].mxu0
      %v625 = vpop.f32.mrb[0].mxu0
      %626 = vdwg.mxu0
      %v628 = vsel %vm444, %v423, 0
      %v631 = vsel %vm444, %v431, 0
      %633 = vmatprep.subr.bf16.mxu0 0
      %634 = vmatpush1.bf16.xpose.msra.mxu0 %v631
      %635 = vmatprep.subr.bf16.mxu0 0
      %636 = vmatpush1.bf16.xpose.msra.mxu0 0
      %637 = vmatprep.subr.bf16.mxu0 0
      %638 = vmatpush1.bf16.xpose.msra.mxu0 0
      %639 = vmatprep.subr.bf16.mxu0 0
      %640 = vmatpush1.bf16.xpose.msra.mxu0 0
      %641 = vmatprep.subr.bf16.mxu0 0
      %642 = vmatpush1.bf16.xpose.msra.mxu0 0
      %643 = vmatprep.subr.bf16.mxu0 0
      %644 = vmatpush1.bf16.xpose.msra.mxu0 0
      %645 = vmatprep.subr.bf16.mxu0 0
      %646 = vmatpush1.bf16.xpose.msra.mxu0 0
      %647 = vmatprep.subr.bf16.mxu0 0
      %648 = vmatpush1.bf16.xpose.msra.mxu0 0
      %649 = vmatprep.subr.bf16.mxu0 0
      %650 = vmatpush1.bf16.xpose.msra.mxu0 0
      %651 = vmatprep.subr.bf16.mxu0 0
      %652 = vmatpush1.bf16.xpose.msra.mxu0 0
      %653 = vmatprep.subr.bf16.mxu0 0
      %654 = vmatpush1.bf16.xpose.msra.mxu0 0
      %655 = vmatprep.subr.bf16.mxu0 0
      %656 = vmatpush1.bf16.xpose.msra.mxu0 0
      %657 = vmatprep.subr.bf16.mxu0 0
      %658 = vmatpush1.bf16.xpose.msra.mxu0 0
      %659 = vmatprep.subr.bf16.mxu0 0
      %660 = vmatpush1.bf16.xpose.msra.mxu0 0
      %661 = vmatprep.subr.bf16.mxu0 0
      %662 = vmatpush1.bf16.xpose.msra.mxu0 0
      %663 = vmatprep.subr.bf16.mxu0 0
      %664 = vmatpush1.bf16.xpose.msra.mxu0 0
      %665 = vmatprep.mubr.bf16.mxu0 0
      %666 = vmatmul.mubr.bf16.gmra.mrb[0].mxu0 %v628
      %v667 = vpop.f32.mrb[0].mxu0
      %v668 = vadd.f32 %v533, %v667
      %v669 = vpop.f32.mrb[0].mxu0
      %v670 = vpop.f32.mrb[0].mxu0
      %v671 = vpop.f32.mrb[0].mxu0
      %672 = vdwg.mxu0
      %v674 = vsel %vm444, %v425, 0
      %v677 = vsel %vm444, %v433, 0
      %679 = vmatprep.subr.bf16.mxu0 0
      %680 = vmatpush1.bf16.xpose.msra.mxu0 %v677
      %681 = vmatprep.subr.bf16.mxu0 0
      %682 = vmatpush1.bf16.xpose.msra.mxu0 0
      %683 = vmatprep.subr.bf16.mxu0 0
      %684 = vmatpush1.bf16.xpose.msra.mxu0 0
      %685 = vmatprep.subr.bf16.mxu0 0
      %686 = vmatpush1.bf16.xpose.msra.mxu0 0
      %687 = vmatprep.subr.bf16.mxu0 0
      %688 = vmatpush1.bf16.xpose.msra.mxu0 0
      %689 = vmatprep.subr.bf16.mxu0 0
      %690 = vmatpush1.bf16.xpose.msra.mxu0 0
      %691 = vmatprep.subr.bf16.mxu0 0
      %692 = vmatpush1.bf16.xpose.msra.mxu0 0
      %693 = vmatprep.subr.bf16.mxu0 0
      %694 = vmatpush1.bf16.xpose.msra.mxu0 0
      %695 = vmatprep.subr.bf16.mxu0 0
      %696 = vmatpush1.bf16.xpose.msra.mxu0 0
      %697 = vmatprep.subr.bf16.mxu0 0
      %698 = vmatpush1.bf16.xpose.msra.mxu0 0
      %699 = vmatprep.subr.bf16.mxu0 0
      %700 = vmatpush1.bf16.xpose.msra.mxu0 0
      %701 = vmatprep.subr.bf16.mxu0 0
      %702 = vmatpush1.bf16.xpose.msra.mxu0 0
      %703 = vmatprep.subr.bf16.mxu0 0
      %704 = vmatpush1.bf16.xpose.msra.mxu0 0
      %705 = vmatprep.subr.bf16.mxu0 0
      %706 = vmatpush1.bf16.xpose.msra.mxu0 0
      %707 = vmatprep.subr.bf16.mxu0 0
      %708 = vmatpush1.bf16.xpose.msra.mxu0 0
      %709 = vmatprep.subr.bf16.mxu0 0
      %710 = vmatpush1.bf16.xpose.msra.mxu0 0
      %711 = vmatprep.mubr.bf16.mxu0 0
      %712 = vmatmul.mubr.bf16.gmra.mrb[0].mxu0 %v674
      %v713 = vpop.f32.mrb[0].mxu0
      %v714 = vadd.f32 %v534, %v713
      %v715 = vpop.f32.mrb[0].mxu0
      %v716 = vpop.f32.mrb[0].mxu0
      %v717 = vpop.f32.mrb[0].mxu0
      %718 = vdwg.mxu0
      %v719 = vld [vmem:[#allocation2] sm:$0xff]
      %v720 = vld [vmem:[#allocation2 + $0x8] sm:$0xff]
      %v721 = vld [vmem:[#allocation2 + $0x10] sm:$0xff]
      %v722 = vld [vmem:[#allocation2 + $0x18] sm:$0xff]
      %vm723 = vcmask 64512
      %v724 = vsel %vm723, %v576, -inf
      %725 = vmax.xlane.f32.xlu0 %v724
      %v726 = vpop.xlane.xlu0 %725
      %v727 = vsel %vm723, %v622, -inf
      %728 = vmax.xlane.f32.xlu0 %v727
      %v729 = vpop.xlane.xlu0 %728
      %v730 = vsel %vm723, %v668, -inf
      %731 = vmax.xlane.f32.xlu0 %v730
      %v732 = vpop.xlane.xlu0 %731
      %v733 = vsel %vm723, %v714, -inf
      %734 = vmax.xlane.f32.xlu0 %v733
      %v735 = vpop.xlane.xlu0 %734
      %v736 = vmax.f32 %v719, %v726
      %v737 = vmax.f32 %v720, %v729
      %v738 = vmax.f32 %v721, %v732
      %v739 = vmax.f32 %v722, %v735
      %v740 = vsub.f32 %v719, %v736
      %v741 = vsub.f32 %v720, %v737
      %v742 = vsub.f32 %v721, %v738
      %v743 = vsub.f32 %v722, %v739
      %v744 = vmul.f32 %v740, 1.442695
      %v745 = vpow.pop %v744
      %v746 = vmul.f32 %v741, 1.442695
      %v747 = vpow.pop %v746
      %v748 = vmul.f32 %v742, 1.442695
      %v749 = vpow.pop %v748
      %v750 = vmul.f32 %v743, 1.442695
      %v751 = vpow.pop %v750
      %753 = vset.pattern.permute.xlu0 0
      %754 = vperm.xlu0 %753, %v736
      %v755 = vpop.permute.xlu0 %754
      %758 = vset.pattern.permute.xlu0 0
      %759 = vperm.xlu0 %758, %v737
      %v760 = vpop.permute.xlu0 %759
      %763 = vset.pattern.permute.xlu0 0
      %764 = vperm.xlu0 %763, %v738
      %v765 = vpop.permute.xlu0 %764
      %768 = vset.pattern.permute.xlu0 0
      %769 = vperm.xlu0 %768, %v739
      %v770 = vpop.permute.xlu0 %769
      %v772 = vsub.f32 %v576, %v755
      %v773 = vsub.f32 %v622, %v760
      %v774 = vsub.f32 %v668, %v765
      %v775 = vsub.f32 %v714, %v770
      %v776 = vmul.f32 %v772, 1.442695
      %v777 = vpow.pop %v776
      %v778 = vmul.f32 %v773, 1.442695
      %v779 = vpow.pop %v778
      %v780 = vmul.f32 %v774, 1.442695
      %v781 = vpow.pop %v780
      %v782 = vmul.f32 %v775, 1.442695
      %v783 = vpow.pop %v782
      %v784 = vld [vmem:[#allocation3] sm:$0xff]
      %v785 = vld [vmem:[#allocation3 + $0x8] sm:$0xff]
      %v786 = vld [vmem:[#allocation3 + $0x10] sm:$0xff]
      %v787 = vld [vmem:[#allocation3 + $0x18] sm:$0xff]
      %v788 = vmul.f32 %v745, %v784
      %v789 = vmul.f32 %v747, %v785
      %v790 = vmul.f32 %v749, %v786
      %v791 = vmul.f32 %v751, %v787
      %v792 = vsel %vm723, %v777, 0.0
      %793 = vadd.xlane.f32.xlu0 %v792
      %v794 = vpop.xlane.xlu0 %793
      %v795 = vsel %vm723, %v779, 0.0
      %796 = vadd.xlane.f32.xlu0 %v795
      %v797 = vpop.xlane.xlu0 %796
      %v798 = vsel %vm723, %v781, 0.0
      %799 = vadd.xlane.f32.xlu0 %v798
      %v800 = vpop.xlane.xlu0 %799
      %v801 = vsel %vm723, %v783, 0.0
      %802 = vadd.xlane.f32.xlu0 %v801
      %v803 = vpop.xlane.xlu0 %802
      %v804 = vadd.f32 %v788, %v794
      %v805 = vadd.f32 %v789, %v797
      %v806 = vadd.f32 %v790, %v800
      %v807 = vadd.f32 %v791, %v803
      %vm808 = vcmask 7168
      %809 = vst.msk [vmem:[#allocation3] sm:$0xff] %vm808, %v804
      %810 = vst.msk [vmem:[#allocation3 + $0x8] sm:$0xff] %vm808, %v805
      %811 = vst.msk [vmem:[#allocation3 + $0x10] sm:$0xff] %vm808, %v806
      %812 = vst.msk [vmem:[#allocation3 + $0x18] sm:$0xff] %vm808, %v807
      %v813 = vpack.c.bf16 %v777, %v777
      %v814 = vpack.c.bf16 %v779, %v779
      %v815 = vpack.c.bf16 %v781, %v781
      %v816 = vpack.c.bf16 %v783, %v783
      %v818 = vsel %vm723, %v813, 0
      %vm820 = vcmask 1043456
      %v822 = vsel %vm820, %v434, 0
      %824 = vmatprep.subr.bf16.mxu0 0
      %825 = vmatpush1.bf16.msra.mxu0 %v822
      %826 = vmatprep.subr.bf16.mxu0 0
      %827 = vmatpush1.bf16.msra.mxu0 0
      %828 = vmatprep.subr.bf16.mxu0 0
      %829 = vmatpush1.bf16.msra.mxu0 0
      %830 = vmatprep.subr.bf16.mxu0 0
      %831 = vmatpush1.bf16.msra.mxu0 0
      %832 = vmatprep.subr.bf16.mxu0 0
      %833 = vmatpush1.bf16.msra.mxu0 0
      %834 = vmatprep.subr.bf16.mxu0 0
      %835 = vmatpush1.bf16.msra.mxu0 0
      %836 = vmatprep.subr.bf16.mxu0 0
      %837 = vmatpush1.bf16.msra.mxu0 0
      %838 = vmatprep.subr.bf16.mxu0 0
      %839 = vmatpush1.bf16.msra.mxu0 0
      %840 = vmatprep.subr.bf16.mxu0 0
      %841 = vmatpush1.bf16.msra.mxu0 0
      %842 = vmatprep.subr.bf16.mxu0 0
      %843 = vmatpush1.bf16.msra.mxu0 0
      %844 = vmatprep.subr.bf16.mxu0 0
      %845 = vmatpush1.bf16.msra.mxu0 0
      %846 = vmatprep.subr.bf16.mxu0 0
      %847 = vmatpush1.bf16.msra.mxu0 0
      %848 = vmatprep.subr.bf16.mxu0 0
      %849 = vmatpush1.bf16.msra.mxu0 0
      %850 = vmatprep.subr.bf16.mxu0 0
      %851 = vmatpush1.bf16.msra.mxu0 0
      %852 = vmatprep.subr.bf16.mxu0 0
      %853 = vmatpush1.bf16.msra.mxu0 0
      %854 = vmatprep.subr.bf16.mxu0 0
      %855 = vmatpush1.bf16.msra.mxu0 0
      %856 = vmatprep.mubr.bf16.mxu0 0
      %857 = vmatmul.mubr.bf16.gmra.mrb[0].mxu0 %v818
      %v858 = vpop.f32.mrb[0].mxu0
      %v859 = vadd.f32 0.0, %v858
      %v860 = vpop.f32.mrb[0].mxu0
      %v861 = vpop.f32.mrb[0].mxu0
      %v862 = vpop.f32.mrb[0].mxu0
      %863 = vdwg.mxu0
      %v865 = vsel %vm723, %v814, 0
      %v868 = vsel %vm820, %v437, 0
      %870 = vmatprep.subr.bf16.mxu0 0
      %871 = vmatpush1.bf16.msra.mxu0 %v868
      %872 = vmatprep.subr.bf16.mxu0 0
      %873 = vmatpush1.bf16.msra.mxu0 0
      %874 = vmatprep.subr.bf16.mxu0 0
      %875 = vmatpush1.bf16.msra.mxu0 0
      %876 = vmatprep.subr.bf16.mxu0 0
      %877 = vmatpush1.bf16.msra.mxu0 0
      %878 = vmatprep.subr.bf16.mxu0 0
      %879 = vmatpush1.bf16.msra.mxu0 0
      %880 = vmatprep.subr.bf16.mxu0 0
      %881 = vmatpush1.bf16.msra.mxu0 0
      %882 = vmatprep.subr.bf16.mxu0 0
      %883 = vmatpush1.bf16.msra.mxu0 0
      %884 = vmatprep.subr.bf16.mxu0 0
      %885 = vmatpush1.bf16.msra.mxu0 0
      %886 = vmatprep.subr.bf16.mxu0 0
      %887 = vmatpush1.bf16.msra.mxu0 0
      %888 = vmatprep.subr.bf16.mxu0 0
      %889 = vmatpush1.bf16.msra.mxu0 0
      %890 = vmatprep.subr.bf16.mxu0 0
      %891 = vmatpush1.bf16.msra.mxu0 0
      %892 = vmatprep.subr.bf16.mxu0 0
      %893 = vmatpush1.bf16.msra.mxu0 0
      %894 = vmatprep.subr.bf16.mxu0 0
      %895 = vmatpush1.bf16.msra.mxu0 0
      %896 = vmatprep.subr.bf16.mxu0 0
      %897 = vmatpush1.bf16.msra.mxu0 0
      %898 = vmatprep.subr.bf16.mxu0 0
      %899 = vmatpush1.bf16.msra.mxu0 0
      %900 = vmatprep.subr.bf16.mxu0 0
      %901 = vmatpush1.bf16.msra.mxu0 0
      %902 = vmatprep.mubr.bf16.mxu0 0
      %903 = vmatmul.mubr.bf16.gmra.mrb[0].mxu0 %v865
      %v904 = vpop.f32.mrb[0].mxu0
      %v905 = vadd.f32 0.0, %v904
      %v906 = vpop.f32.mrb[0].mxu0
      %v907 = vpop.f32.mrb[0].mxu0
      %v908 = vpop.f32.mrb[0].mxu0
      %909 = vdwg.mxu0
      %v911 = vsel %vm723, %v815, 0
      %v914 = vsel %vm820, %v439, 0
      %916 = vmatprep.subr.bf16.mxu0 0
      %917 = vmatpush1.bf16.msra.mxu0 %v914
      %918 = vmatprep.subr.bf16.mxu0 0
      %919 = vmatpush1.bf16.msra.mxu0 0
      %920 = vmatprep.subr.bf16.mxu0 0
      %921 = vmatpush1.bf16.msra.mxu0 0
      %922 = vmatprep.subr.bf16.mxu0 0
      %923 = vmatpush1.bf16.msra.mxu0 0
      %924 = vmatprep.subr.bf16.mxu0 0
      %925 = vmatpush1.bf16.msra.mxu0 0
      %926 = vmatprep.subr.bf16.mxu0 0
      %927 = vmatpush1.bf16.msra.mxu0 0
      %928 = vmatprep.subr.bf16.mxu0 0
      %929 = vmatpush1.bf16.msra.mxu0 0
      %930 = vmatprep.subr.bf16.mxu0 0
      %931 = vmatpush1.bf16.msra.mxu0 0
      %932 = vmatprep.subr.bf16.mxu0 0
      %933 = vmatpush1.bf16.msra.mxu0 0
      %934 = vmatprep.subr.bf16.mxu0 0
      %935 = vmatpush1.bf16.msra.mxu0 0
      %936 = vmatprep.subr.bf16.mxu0 0
      %937 = vmatpush1.bf16.msra.mxu0 0
      %938 = vmatprep.subr.bf16.mxu0 0
      %939 = vmatpush1.bf16.msra.mxu0 0
      %940 = vmatprep.subr.bf16.mxu0 0
      %941 = vmatpush1.bf16.msra.mxu0 0
      %942 = vmatprep.subr.bf16.mxu0 0
      %943 = vmatpush1.bf16.msra.mxu0 0
      %944 = vmatprep.subr.bf16.mxu0 0
      %945 = vmatpush1.bf16.msra.mxu0 0
      %946 = vmatprep.subr.bf16.mxu0 0
      %947 = vmatpush1.bf16.msra.mxu0 0
      %948 = vmatprep.mubr.bf16.mxu0 0
      %949 = vmatmul.mubr.bf16.gmra.mrb[0].mxu0 %v911
      %v950 = vpop.f32.mrb[0].mxu0
      %v951 = vadd.f32 0.0, %v950
      %v952 = vpop.f32.mrb[0].mxu0
      %v953 = vpop.f32.mrb[0].mxu0
      %v954 = vpop.f32.mrb[0].mxu0
      %955 = vdwg.mxu0
      %v957 = vsel %vm723, %v816, 0
      %v960 = vsel %vm820, %v441, 0
      %962 = vmatprep.subr.bf16.mxu0 0
      %963 = vmatpush1.bf16.msra.mxu0 %v960
      %964 = vmatprep.subr.bf16.mxu0 0
      %965 = vmatpush1.bf16.msra.mxu0 0
      %966 = vmatprep.subr.bf16.mxu0 0
      %967 = vmatpush1.bf16.msra.mxu0 0
      %968 = vmatprep.subr.bf16.mxu0 0
      %969 = vmatpush1.bf16.msra.mxu0 0
      %970 = vmatprep.subr.bf16.mxu0 0
      %971 = vmatpush1.bf16.msra.mxu0 0
      %972 = vmatprep.subr.bf16.mxu0 0
      %973 = vmatpush1.bf16.msra.mxu0 0
      %974 = vmatprep.subr.bf16.mxu0 0
      %975 = vmatpush1.bf16.msra.mxu0 0
      %976 = vmatprep.subr.bf16.mxu0 0
      %977 = vmatpush1.bf16.msra.mxu0 0
      %978 = vmatprep.subr.bf16.mxu0 0
      %979 = vmatpush1.bf16.msra.mxu0 0
      %980 = vmatprep.subr.bf16.mxu0 0
      %981 = vmatpush1.bf16.msra.mxu0 0
      %982 = vmatprep.subr.bf16.mxu0 0
      %983 = vmatpush1.bf16.msra.mxu0 0
      %984 = vmatprep.subr.bf16.mxu0 0
      %985 = vmatpush1.bf16.msra.mxu0 0
      %986 = vmatprep.subr.bf16.mxu0 0
      %987 = vmatpush1.bf16.msra.mxu0 0
      %988 = vmatprep.subr.bf16.mxu0 0
      %989 = vmatpush1.bf16.msra.mxu0 0
      %990 = vmatprep.subr.bf16.mxu0 0
      %991 = vmatpush1.bf16.msra.mxu0 0
      %992 = vmatprep.subr.bf16.mxu0 0
      %993 = vmatpush1.bf16.msra.mxu0 0
      %994 = vmatprep.mubr.bf16.mxu0 0
      %995 = vmatmul.mubr.bf16.gmra.mrb[0].mxu0 %v957
      %v996 = vpop.f32.mrb[0].mxu0
      %v997 = vadd.f32 0.0, %v996
      %v998 = vpop.f32.mrb[0].mxu0
      %v999 = vpop.f32.mrb[0].mxu0
      %v1000 = vpop.f32.mrb[0].mxu0
      %1001 = vdwg.mxu0
      %v1002 = vld [vmem:[#allocation4] sm:$0xff]
      %v1003 = vld [vmem:[#allocation4 + $0x8] sm:$0xff]
      %v1004 = vld [vmem:[#allocation4 + $0x10] sm:$0xff]
      %v1005 = vld [vmem:[#allocation4 + $0x18] sm:$0xff]
      %1007 = vset.pattern.permute.xlu0 0
      %1008 = vperm.xlu0 %1007, %v745
      %v1009 = vpop.permute.xlu0 %1008
      %1012 = vset.pattern.permute.xlu0 0
      %1013 = vperm.xlu0 %1012, %v747
      %v1014 = vpop.permute.xlu0 %1013
      %1017 = vset.pattern.permute.xlu0 0
      %1018 = vperm.xlu0 %1017, %v749
      %v1019 = vpop.permute.xlu0 %1018
      %1022 = vset.pattern.permute.xlu0 0
      %1023 = vperm.xlu0 %1022, %v751
      %v1024 = vpop.permute.xlu0 %1023
      %v1026 = vmul.f32 %v1009, %v1002
      %v1027 = vmul.f32 %v1014, %v1003
      %v1028 = vmul.f32 %v1019, %v1004
      %v1029 = vmul.f32 %v1024, %v1005
      %v1030 = vadd.f32 %v1026, %v859
      %v1031 = vadd.f32 %v1027, %v905
      %v1032 = vadd.f32 %v1028, %v951
      %v1033 = vadd.f32 %v1029, %v997
      %1034 = vst.msk [vmem:[#allocation4] sm:$0xff] %vm444, %v1030
      %1035 = vst.msk [vmem:[#allocation4 + $0x8] sm:$0xff] %vm444, %v1031
      %1036 = vst.msk [vmem:[#allocation4 + $0x10] sm:$0xff] %vm444, %v1032
      %1037 = vst.msk [vmem:[#allocation4 + $0x18] sm:$0xff] %vm444, %v1033
      %1038 = vst.msk [vmem:[#allocation2] sm:$0xff] %vm808, %v736
      %1039 = vst.msk [vmem:[#allocation2 + $0x8] sm:$0xff] %vm808, %v737
      %1040 = vst.msk [vmem:[#allocation2 + $0x10] sm:$0xff] %vm808, %v738
      %1041 = vst.msk [vmem:[#allocation2 + $0x18] sm:$0xff] %vm808, %v739
      // Predicated region
      $region49: #{disentangled_attention.4} parent=43 // pred_check
        %p1042 = pneg %p400
      $region50: #{disentangled_attention.4} parent=43 // pred_check_branch
        %1044 = sbr.rel (%p1042) target = $region52
      $region51: #{disentangled_attention.4} parent=43 // pred_region
        %v1045 = vld [vmem:[#allocation4] sm:$0xff]
        %v1046 = vld [vmem:[#allocation4 + $0x8] sm:$0xff]
        %v1047 = vld [vmem:[#allocation4 + $0x10] sm:$0xff]
        %v1048 = vld [vmem:[#allocation4 + $0x18] sm:$0xff]
        %v1049 = vld [vmem:[#allocation3] sm:$0xff]
        %v1050 = vld [vmem:[#allocation3 + $0x8] sm:$0xff]
        %v1051 = vld [vmem:[#allocation3 + $0x10] sm:$0xff]
        %v1052 = vld [vmem:[#allocation3 + $0x18] sm:$0xff]
        %1054 = vset.pattern.permute.xlu0 0
        %1055 = vperm.xlu0 %1054, %v1049
        %v1056 = vpop.permute.xlu0 %1055
        %1059 = vset.pattern.permute.xlu0 0
        %1060 = vperm.xlu0 %1059, %v1050
        %v1061 = vpop.permute.xlu0 %1060
        %1064 = vset.pattern.permute.xlu0 0
        %1065 = vperm.xlu0 %1064, %v1051
        %v1066 = vpop.permute.xlu0 %1065
        %1069 = vset.pattern.permute.xlu0 0
        %1070 = vperm.xlu0 %1069, %v1052
        %v1071 = vpop.permute.xlu0 %1070
        %v1073 = vrcp.pop %v1056
        %v1074 = vmul.f32 %v1045, %v1073
        %v1075 = vrcp.pop %v1061
        %v1076 = vmul.f32 %v1046, %v1075
        %v1077 = vrcp.pop %v1066
        %v1078 = vmul.f32 %v1047, %v1077
        %v1079 = vrcp.pop %v1071
        %v1080 = vmul.f32 %v1048, %v1079
        %1082 = vrot.lane.b32.xlu0 %v1076, 32
        %v1083 = vpop.permute.xlu0 %1082
        %1086 = vrot.lane.b32.xlu0 %v1078, 64
        %v1087 = vpop.permute.xlu0 %1086
        %1090 = vrot.lane.b32.xlu0 %v1080, 96
        %v1091 = vpop.permute.xlu0 %1090
        %v1093 = vsel %vm444, %v1074, %v1083
        %vm1094 = vcmask 523264
        %v1095 = vsel %vm1094, %v1093, %v1087
        %vm1096 = vcmask 785408
        %v1097 = vsel %vm1096, %v1095, %v1091
        %v1098 = vpack.c.bf16 %v1097, %v1097
        %1099 = vst [vmem:[%s398] sm:$0xf] %v1098
      $region52: #{disentangled_attention.4} parent=43 // pred_fallthru
        _
      %p1100 = scmp.lt.s32.totalorder %s22, 1
      %s1101 = scalar_select %p1100, %s22, 1
      %p1102 = scmp.lt.s32.totalorder %s23, 0
      %s1103 = scalar_select %p1102, %s23, 0
      %s1104 = sadd.s32 %s1103, %s1101
      %s1105 = smul.addr %s1104, 4
      %s1106 = scalar_lea.vmem %s6, %s1105
      // Predicated region
      $region53: #{disentangled_attention.4} parent=43 // pred_check
        %p1107 = pneg %p213
      $region54: #{disentangled_attention.4} parent=43 // pred_check_branch
        %1109 = sbr.rel (%p1107) target = $region56
      $region55: #{disentangled_attention.4} parent=43 // pred_region
        _
      $region56: #{disentangled_attention.4} parent=43 // pred_fallthru
        _
    $region44: #{disentangled_attention.4} parent=5 // pred_fallthru
      _
    %p1110 = scmp.le.s32.totalorder 2, %s12
    // Predicated region
    $region57: #{disentangled_attention.4} parent=5 // pred_check
      %p1111 = pneg %p1110
    $region58: #{disentangled_attention.4} parent=5 // pred_check_branch
      %1113 = sbr.rel (%p1111) target = $region60
    $region59: #{disentangled_attention.4} parent=5 // pred_region
      %s1114 = ssub.s32 %s12, 2
      // Predicated region
      $region61: #{disentangled_attention.4} parent=59 // pred_check
        %p1115 = pneg %p219
      $region62: #{disentangled_attention.4} parent=59 // pred_check_branch
        %1117 = sbr.rel (%p1115) target = $region64
      $region63: #{disentangled_attention.4} parent=59 // pred_region
        %p1118 = scmp.lt.s32.totalorder %s25, 1
        %s1119 = scalar_select %p1118, %s25, 1
        %p1120 = scmp.lt.s32.totalorder %s26, 0
        %s1121 = scalar_select %p1120, %s26, 0
        %s1122 = sadd.s32 %s1121, %s1119
        %s1123 = smul.addr %s1122, 4
        %s1124 = scalar_lea.vmem %s6, %s1123
      $region64: #{disentangled_attention.4} parent=59 // pred_fallthru
        _
    $region60: #{disentangled_attention.4} parent=5 // pred_fallthru
      _
  $region6: #{disentangled_attention.4} parent=0 // loop_footer
    %s16 = sadd.s32 1, %s12
  $region7: #{disentangled_attention.4} parent=0 // loop_footer_branch
    %11 = sbr.rel target = $region3
  $region8: #{disentangled_attention.4} parent=0 // loop_exit
    _

</llo_original>
